<compile_context>
chip_gen: v7x
topology: tpu7x:2x2x1
jax: 0.10.0
libtpu: 0.0.40
codegen_flags: <defaults>
</compile_context>

<pallas_src>
import functools
import math

import jax
import jax.numpy as jnp
from jax.experimental import pallas as pl
from jax.experimental.pallas import tpu as pltpu


# ----------------------------------------------------------------------------
# Fused Pallas kernel: one full pred_forward per grid step (one sample)
# ----------------------------------------------------------------------------
def fused_pred_kernel(x_ref, a_ref, w1_ref, w2_ref, c1_ref, c2_ref,
                      b1_ref, b2_ref, out_ref, *, nhid, nclass):
    """Fused 2-stage interactive GCN forward for a single sample.

    x_ref  : (1, 3, N, Fin)       three view feature matrices
    a_ref  : (1, 3, N, N)         three view adjacencies
    w1_ref : (3, Fin, 3*nhid)     per-view column-packed stage-1 weights
    w2_ref : (3, nhid, 3*nclass)  per-view column-packed stage-2 weights
    c1_ref : (3, 3*nhid)          per-view column scales (1.01 * view weights)
    c2_ref : (3, 3*nclass)
    b1_ref : (3, nhid)            stage-1 biases (row l = layer gc1_{l+1})
    b2_ref : (3, nclass)
    out_ref: (1, N, nclass)
    """
    f32 = jnp.float32

    # Adjacencies loaded once, reused by both stages.
    a = [a_ref[0, v] for v in range(3)]

    # ---------------- stage 1: gc1_1 / gc1_2 / gc1_3 (6 matmuls) -------------
    e1 = []
    nsum1 = None
    for v in range(3):
        ev = jnp.dot(x_ref[0, v], w1_ref[v], preferred_element_type=f32)
        nv = jnp.dot(a[v], ev, preferred_element_type=f32) * c1_ref[v:v + 1, :]
        e1.append(ev)
        nsum1 = nv if nsum1 is None else nsum1 + nv

    h = []
    for l in range(3):
        sl = slice(l * nhid, (l + 1) * nhid)
        hl = e1[l][:, sl] + nsum1[:, sl] + b1_ref[l:l + 1, :]
        h.append(jnp.maximum(hl, 0.0))            # F.relu
    # TODO(synk): F.dropout is skipped (predict() path -> eval mode identity).

    # ---------------- stage 2: gc2_1 / gc2_2 / gc2_3 (6 matmuls) -------------
    e2 = []
    nsum2 = None
    for v in range(3):
        ev = jnp.dot(h[v], w2_ref[v], preferred_element_type=f32)
        nv = jnp.dot(a[v], ev, preferred_element_type=f32) * c2_ref[v:v + 1, :]
        e2.append(ev)
        nsum2 = nv if nsum2 is None else nsum2 + nv

    acc = None
    for l in range(3):
        sl = slice(l * nclass, (l + 1) * nclass)
        ol = e2[l][:, sl] + nsum2[:, sl] + b2_ref[l:l + 1, :]
        ol = jnp.maximum(ol, 0.0)                 # F.relu
        acc = ol if acc is None else acc + ol

    # combine: abs((o1 + o2 + o3) / 3)
    out_ref[0] = jnp.abs(acc * (1.0 / 3.0))


# ----------------------------------------------------------------------------
# Host-side parameter packing (done once per parameter set)
# ----------------------------------------------------------------------------
def _pack_layer_group(g1, g2, g3):
    """Pack three IGC layers that share the cyclic view-permutation structure.

    Each g* = (w_self, w_v2, w_v3, w_views(1,3), bias(1,fout)).
    Returns (w_packed (3,fin,3*fout), c_packed (3,3*fout), b_packed (3,fout)).
    Column block l of w_packed[v] is the weight that view v multiplies in
    layer l; c_packed already includes the 1.01 factor.
    """
    fout = g1[0].shape[1]
    # view0 is: self in layer0, view2 in layer1, view2 in layer2
    w0 = jnp.concatenate([g1[0], g2[1], g3[1]], axis=1)
    # view1 is: view2 in layer0, self in layer1, view3 in layer2
    w1 = jnp.concatenate([g1[1], g2[0], g3[2]], axis=1)
    # view2 is: view3 in layer0, view3 in layer1, self in layer2
    w2 = jnp.concatenate([g1[2], g2[2], g3[0]], axis=1)
    w_packed = jnp.stack([w0, w1, w2])                      # (3, fin, 3*fout)

    # role(v, l): index into layer l's weight_all_views for view v
    roles = ((0, 1, 1), (1, 0, 2), (2, 2, 0))
    wvs = (g1[3], g2[3], g3[3])                             # each (1, 3)
    c_scalars = 1.01 * jnp.stack(
        [jnp.stack([wvs[l][0, roles[v][l]] for l in range(3)])
         for v in range(3)])                                # (3, 3)
    c_packed = jnp.repeat(c_scalars, fout, axis=1)          # (3, 3*fout)

    b_packed = jnp.concatenate([g1[4], g2[4], g3[4]], axis=0)  # (3, fout)
    return w_packed, c_packed, b_packed


def pack_embedding_params(embedding_params):
    g11, g12, g13, g21, g22, g23 = embedding_params
    w1p, c1p, b1p = _pack_layer_group(g11, g12, g13)
    w2p, c2p, b2p = _pack_layer_group(g21, g22, g23)
    return (w1p, w2p, c1p, c2p, b1p, b2p)


# ----------------------------------------------------------------------------
# Batched, jitted wrapper: one pallas_call for ALL samples
# ----------------------------------------------------------------------------
@jax.jit
def pred_forward_batched(xs, adjs, packed):
    """xs: (S, 3, N, Fin) float32; adjs: (S, 3, N, N) float32 -> (S, N, nclass)."""
    w1p, w2p, c1p, c2p, b1p, b2p = packed
    S, _, N, fin = xs.shape
    nhid = w1p.shape[2] // 3
    nclass = w2p.shape[2] // 3

    kernel = functools.partial(fused_pred_kernel, nhid=nhid, nclass=nclass)
    return pl.pallas_call(
        kernel,
        out_shape=jax.ShapeDtypeStruct((S, N, nclass), jnp.float32),
        grid=(S,),
        in_specs=[
            pl.BlockSpec((1, 3, N, fin), lambda s: (s, 0, 0, 0)),
            pl.BlockSpec((1, 3, N, N), lambda s: (s, 0, 0, 0)),
            pl.BlockSpec(w1p.shape, lambda s: (0, 0, 0)),
            pl.BlockSpec(w2p.shape, lambda s: (0, 0, 0)),
            pl.BlockSpec(c1p.shape, lambda s: (0, 0)),
            pl.BlockSpec(c2p.shape, lambda s: (0, 0)),
            pl.BlockSpec(b1p.shape, lambda s: (0, 0)),
            pl.BlockSpec(b2p.shape, lambda s: (0, 0)),
        ],
        out_specs=pl.BlockSpec((1, N, nclass), lambda s: (s, 0, 0)),
        compiler_params=pltpu.CompilerParams(
            dimension_semantics=("parallel",)),
    )(xs, adjs, w1p, w2p, c1p, c2p, b1p, b2p)


def pred_forward(views, embedding_params):
    """Embedding.pred_forward for a single sample (eval path)."""
    packed = pack_embedding_params(embedding_params)
    xs = jnp.stack([v[0] for v in views])[None]
    adjs = jnp.stack([v[1] for v in views])[None]
    return pred_forward_batched(xs, adjs, packed)[0]


def globalvar_predict(list_of_views, embedding_params):
    """GlobalVar.predict: batches every sample into a single fused kernel."""
    packed = pack_embedding_params(embedding_params)
    xs = jnp.stack([jnp.stack([v[0] for v in views]) for views in list_of_views])
    adjs = jnp.stack([jnp.stack([v[1] for v in views]) for views in list_of_views])
    out = pred_forward_batched(xs, adjs, packed)
    return [out[s] for s in range(out.shape[0])]


# ----------------------------------------------------------------------------
# Deterministic parameter initialization (mirrors reset_parameters)
# ----------------------------------------------------------------------------
def init_igc_params(key, fin, fout):
    ks = jax.random.split(key, 5)
    stdv_w = 1.0 / math.sqrt(fout)
    stdv_v = 1.0 / math.sqrt(3.0)  # weight_all_views.size(1) == 3
    w_self = jax.random.uniform(ks[0], (fin, fout), jnp.float32, -stdv_w, stdv_w)
    w_v2 = jax.random.uniform(ks[1], (fin, fout), jnp.float32, -stdv_w, stdv_w)
    w_v3 = jax.random.uniform(ks[2], (fin, fout), jnp.float32, -stdv_w, stdv_w)
    w_views = jax.random.uniform(ks[3], (1, 3), jnp.float32, -stdv_v, stdv_v)
    # NOTE: in the PyTorch code the bias uses the *last* stdv (1/sqrt(3)).
    bias = jax.random.uniform(ks[4], (1, fout), jnp.float32, -stdv_v, stdv_v)
    return (w_self, w_v2, w_v3, w_views, bias)


def init_embedding_params(key, nfeat, nhid, nclass):
    ks = jax.random.split(key, 6)
    return (
        init_igc_params(ks[0], nfeat, nhid),
        init_igc_params(ks[1], nfeat, nhid),
        init_igc_params(ks[2], nfeat, nhid),
        init_igc_params(ks[3], nhid, nclass),
        init_igc_params(ks[4], nhid, nclass),
        init_igc_params(ks[5], nhid, nclass),
    )


# ----------------------------------------------------------------------------
# Pure-JAX reference (mirrors the PyTorch forward exactly) for verification
# ----------------------------------------------------------------------------
def igc_ref(sx, sa, v2x, v2a, v3x, v3a, params, apply_relu):
    w_self, w_v2, w_v3, wv, b = params
    se, e2, e3 = sx @ w_self, v2x @ w_v2, v3x @ w_v3
    agg = wv[0, 0] * (sa @ se) + wv[0, 1] * (v2a @ e2) + wv[0, 2] * (v3a @ e3)
    out = se + 1.01 * agg + b
    return jnp.maximum(out, 0.0) if apply_relu else out


def pred_forward_ref(views, params):
    g11, g12, g13, g21, g22, g23 = params
    (x0, a0), (x1v, a1), (x2v, a2) = views
    h1 = igc_ref(x0, a0, x1v, a1, x2v, a2, g11, True)
    h2 = igc_ref(x1v, a1, x0, a0, x2v, a2, g12, True)
    h3 = igc_ref(x2v, a2, x0, a0, x1v, a1, g13, True)
    o1 = igc_ref(h1, a0, h2, a1, h3, a2, g21, True)
    o2 = igc_ref(h2, a1, h1, a0, h3, a2, g22, True)
    o3 = igc_ref(h3, a2, h1, a0, h2, a1, g23, True)
    return jnp.abs((o1 + o2 + o3) / 3.0)


# ----------------------------------------------------------------------------
if __name__ == "__main__":
    N_NODES = 8      # nodes per graph
    NFEAT = 16       # Embedding_nfeat
    NHID = 32        # Embedding_nhid
    NCLASS = 8       # Embedding_nclass
    N_SAMPLES = 2    # number of view-sets (graphs)

    key = jax.random.PRNGKey(0)
    key_p, key_d = jax.random.split(key)
    params = init_embedding_params(key_p, NFEAT, NHID, NCLASS)

    # Build N_SAMPLES samples, each with 3 views of (features, adjacency).
    dkeys = jax.random.split(key_d, N_SAMPLES * 3 * 2).reshape(N_SAMPLES, 3, 2, 2)
    all_views = []
    for s in range(N_SAMPLES):
        views = []
        for v in range(3):
            x = jax.random.normal(dkeys[s, v, 0], (N_NODES, NFEAT), jnp.float32)
            adj = jax.random.uniform(dkeys[s, v, 1], (N_NODES, N_NODES),
                                     jnp.float32)
            views.append((x, adj))
        all_views.append(views)

    outputs = globalvar_predict(all_views, params)
    outputs = jax.block_until_ready(outputs)

    # Verify against pure-JAX reference (tolerance covers 1.01-folding reassoc).
    for s in range(N_SAMPLES):
        ref = pred_forward_ref(all_views[s], params)
        assert outputs[s].shape == (N_NODES, NCLASS)
        assert jnp.allclose(outputs[s], ref, atol=1e-4, rtol=1e-4), \
            f"mismatch on sample {s}"

    print("KERNEL_OK")
</pallas_src>

<mosaic_0001>
module attributes {stable_mosaic.version = 11 : i64} {
  func.func @fused_pred_kernel(%arg0: i32, %arg1: memref<1x3x8x16xf32, #tpu.memory_space<vmem>>, %arg2: memref<1x3x8x8xf32, #tpu.memory_space<vmem>>, %arg3: memref<3x16x96xf32, #tpu.memory_space<vmem>>, %arg4: memref<3x32x24xf32, #tpu.memory_space<vmem>>, %arg5: memref<3x96xf32, #tpu.memory_space<vmem>>, %arg6: memref<3x24xf32, #tpu.memory_space<vmem>>, %arg7: memref<3x32xf32, #tpu.memory_space<vmem>>, %arg8: memref<3x8xf32, #tpu.memory_space<vmem>>, %arg9: memref<1x8x8xf32, #tpu.memory_space<vmem>>) attributes {dimension_semantics = [#tpu.dimension_semantics<parallel>], iteration_bounds = array<i64: 2>, scalar_prefetch = 0 : i64, scratch_operands = 0 : i64, tpu.core_type = #tpu.core_type<tc>, window_params = [{transform_indices = @transform_0, window_bounds = array<i64: 1, 3, 8, 16>}, {transform_indices = @transform_1, window_bounds = array<i64: 1, 3, 8, 8>}, {pipeline_mode = #tpu.pipeline_mode<synchronous>, transform_indices = @transform_2, window_bounds = array<i64: 3, 16, 96>}, {pipeline_mode = #tpu.pipeline_mode<synchronous>, transform_indices = @transform_3, window_bounds = array<i64: 3, 32, 24>}, {pipeline_mode = #tpu.pipeline_mode<synchronous>, transform_indices = @transform_4, window_bounds = array<i64: 3, 96>}, {pipeline_mode = #tpu.pipeline_mode<synchronous>, transform_indices = @transform_5, window_bounds = array<i64: 3, 24>}, {pipeline_mode = #tpu.pipeline_mode<synchronous>, transform_indices = @transform_6, window_bounds = array<i64: 3, 32>}, {pipeline_mode = #tpu.pipeline_mode<synchronous>, transform_indices = @transform_7, window_bounds = array<i64: 3, 8>}, {transform_indices = @transform_8, window_bounds = array<i64: 1, 8, 8>}]} {
    %c0 = arith.constant 0 : index
    %c0_0 = arith.constant 0 : index
    %c0_1 = arith.constant 0 : index
    %c0_2 = arith.constant 0 : index
    %0 = vector.load %arg2[%c0, %c0_0, %c0_1, %c0_2] : memref<1x3x8x8xf32, #tpu.memory_space<vmem>>, vector<1x1x8x8xf32>
    %1 = vector.shape_cast %0 : vector<1x1x8x8xf32> to vector<8x8xf32>
    %c0_3 = arith.constant 0 : index
    %c1 = arith.constant 1 : index
    %c0_4 = arith.constant 0 : index
    %c0_5 = arith.constant 0 : index
    %2 = vector.load %arg2[%c0_3, %c1, %c0_4, %c0_5] : memref<1x3x8x8xf32, #tpu.memory_space<vmem>>, vector<1x1x8x8xf32>
    %3 = vector.shape_cast %2 : vector<1x1x8x8xf32> to vector<8x8xf32>
    %c0_6 = arith.constant 0 : index
    %c2 = arith.constant 2 : index
    %c0_7 = arith.constant 0 : index
    %c0_8 = arith.constant 0 : index
    %4 = vector.load %arg2[%c0_6, %c2, %c0_7, %c0_8] : memref<1x3x8x8xf32, #tpu.memory_space<vmem>>, vector<1x1x8x8xf32>
    %5 = vector.shape_cast %4 : vector<1x1x8x8xf32> to vector<8x8xf32>
    %c0_9 = arith.constant 0 : index
    %c0_10 = arith.constant 0 : index
    %c0_11 = arith.constant 0 : index
    %c0_12 = arith.constant 0 : index
    %6 = vector.load %arg1[%c0_9, %c0_10, %c0_11, %c0_12] : memref<1x3x8x16xf32, #tpu.memory_space<vmem>>, vector<1x1x8x16xf32>
    %7 = vector.shape_cast %6 : vector<1x1x8x16xf32> to vector<8x16xf32>
    %c0_13 = arith.constant 0 : index
    %c0_14 = arith.constant 0 : index
    %c0_15 = arith.constant 0 : index
    %8 = vector.load %arg3[%c0_13, %c0_14, %c0_15] : memref<3x16x96xf32, #tpu.memory_space<vmem>>, vector<1x16x96xf32>
    %9 = vector.shape_cast %8 : vector<1x16x96xf32> to vector<16x96xf32>
    %cst = arith.constant dense<0.000000e+00> : vector<8x96xf32>
    %10 = tpu.matmul %7, %9, %cst {dimension_numbers = #tpu.dot_dimension_numbers<[1], [0], [0], [1], [0, 0, 1, 1], [], []>} : vector<8x16xf32>, vector<16x96xf32>, vector<8x96xf32> -> vector<8x96xf32>
    %cst_16 = arith.constant dense<0.000000e+00> : vector<8x96xf32>
    %11 = tpu.matmul %1, %10, %cst_16 {dimension_numbers = #tpu.dot_dimension_numbers<[1], [0], [0], [1], [0, 0, 1, 1], [], []>} : vector<8x8xf32>, vector<8x96xf32>, vector<8x96xf32> -> vector<8x96xf32>
    %c0_17 = arith.constant 0 : index
    %c0_18 = arith.constant 0 : index
    %12 = vector.load %arg5[%c0_17, %c0_18] : memref<3x96xf32, #tpu.memory_space<vmem>>, vector<1x96xf32>
    %13 = vector.broadcast %12 : vector<1x96xf32> to vector<8x96xf32>
    %14 = arith.mulf %11, %13 : vector<8x96xf32>
    %c0_19 = arith.constant 0 : index
    %c1_20 = arith.constant 1 : index
    %c0_21 = arith.constant 0 : index
    %c0_22 = arith.constant 0 : index
    %15 = vector.load %arg1[%c0_19, %c1_20, %c0_21, %c0_22] : memref<1x3x8x16xf32, #tpu.memory_space<vmem>>, vector<1x1x8x16xf32>
    %16 = vector.shape_cast %15 : vector<1x1x8x16xf32> to vector<8x16xf32>
    %c1_23 = arith.constant 1 : index
    %c0_24 = arith.constant 0 : index
    %c0_25 = arith.constant 0 : index
    %17 = vector.load %arg3[%c1_23, %c0_24, %c0_25] : memref<3x16x96xf32, #tpu.memory_space<vmem>>, vector<1x16x96xf32>
    %18 = vector.shape_cast %17 : vector<1x16x96xf32> to vector<16x96xf32>
    %cst_26 = arith.constant dense<0.000000e+00> : vector<8x96xf32>
    %19 = tpu.matmul %16, %18, %cst_26 {dimension_numbers = #tpu.dot_dimension_numbers<[1], [0], [0], [1], [0, 0, 1, 1], [], []>} : vector<8x16xf32>, vector<16x96xf32>, vector<8x96xf32> -> vector<8x96xf32>
    %cst_27 = arith.constant dense<0.000000e+00> : vector<8x96xf32>
    %20 = tpu.matmul %3, %19, %cst_27 {dimension_numbers = #tpu.dot_dimension_numbers<[1], [0], [0], [1], [0, 0, 1, 1], [], []>} : vector<8x8xf32>, vector<8x96xf32>, vector<8x96xf32> -> vector<8x96xf32>
    %c1_28 = arith.constant 1 : index
    %c0_29 = arith.constant 0 : index
    %21 = vector.load %arg5[%c1_28, %c0_29] : memref<3x96xf32, #tpu.memory_space<vmem>>, vector<1x96xf32>
    %22 = vector.broadcast %21 : vector<1x96xf32> to vector<8x96xf32>
    %23 = arith.mulf %20, %22 : vector<8x96xf32>
    %24 = arith.addf %14, %23 : vector<8x96xf32>
    %c0_30 = arith.constant 0 : index
    %c2_31 = arith.constant 2 : index
    %c0_32 = arith.constant 0 : index
    %c0_33 = arith.constant 0 : index
    %25 = vector.load %arg1[%c0_30, %c2_31, %c0_32, %c0_33] : memref<1x3x8x16xf32, #tpu.memory_space<vmem>>, vector<1x1x8x16xf32>
    %26 = vector.shape_cast %25 : vector<1x1x8x16xf32> to vector<8x16xf32>
    %c2_34 = arith.constant 2 : index
    %c0_35 = arith.constant 0 : index
    %c0_36 = arith.constant 0 : index
    %27 = vector.load %arg3[%c2_34, %c0_35, %c0_36] : memref<3x16x96xf32, #tpu.memory_space<vmem>>, vector<1x16x96xf32>
    %28 = vector.shape_cast %27 : vector<1x16x96xf32> to vector<16x96xf32>
    %cst_37 = arith.constant dense<0.000000e+00> : vector<8x96xf32>
    %29 = tpu.matmul %26, %28, %cst_37 {dimension_numbers = #tpu.dot_dimension_numbers<[1], [0], [0], [1], [0, 0, 1, 1], [], []>} : vector<8x16xf32>, vector<16x96xf32>, vector<8x96xf32> -> vector<8x96xf32>
    %cst_38 = arith.constant dense<0.000000e+00> : vector<8x96xf32>
    %30 = tpu.matmul %5, %29, %cst_38 {dimension_numbers = #tpu.dot_dimension_numbers<[1], [0], [0], [1], [0, 0, 1, 1], [], []>} : vector<8x8xf32>, vector<8x96xf32>, vector<8x96xf32> -> vector<8x96xf32>
    %c2_39 = arith.constant 2 : index
    %c0_40 = arith.constant 0 : index
    %31 = vector.load %arg5[%c2_39, %c0_40] : memref<3x96xf32, #tpu.memory_space<vmem>>, vector<1x96xf32>
    %32 = vector.broadcast %31 : vector<1x96xf32> to vector<8x96xf32>
    %33 = arith.mulf %30, %32 : vector<8x96xf32>
    %34 = arith.addf %24, %33 : vector<8x96xf32>
    %35 = vector.extract_strided_slice %10 {offsets = [0, 0], sizes = [8, 32], strides = [1, 1]} : vector<8x96xf32> to vector<8x32xf32>
    %36 = vector.extract_strided_slice %34 {offsets = [0, 0], sizes = [8, 32], strides = [1, 1]} : vector<8x96xf32> to vector<8x32xf32>
    %37 = arith.addf %35, %36 : vector<8x32xf32>
    %c0_41 = arith.constant 0 : index
    %c0_42 = arith.constant 0 : index
    %38 = vector.load %arg7[%c0_41, %c0_42] : memref<3x32xf32, #tpu.memory_space<vmem>>, vector<1x32xf32>
    %39 = vector.broadcast %38 : vector<1x32xf32> to vector<8x32xf32>
    %40 = arith.addf %37, %39 : vector<8x32xf32>
    %cst_43 = arith.constant 0.000000e+00 : f32
    %41 = vector.broadcast %cst_43 : f32 to vector<8x32xf32>
    %42 = arith.maximumf %40, %41 : vector<8x32xf32>
    %43 = vector.extract_strided_slice %19 {offsets = [0, 32], sizes = [8, 32], strides = [1, 1]} : vector<8x96xf32> to vector<8x32xf32>
    %44 = vector.extract_strided_slice %34 {offsets = [0, 32], sizes = [8, 32], strides = [1, 1]} : vector<8x96xf32> to vector<8x32xf32>
    %45 = arith.addf %43, %44 : vector<8x32xf32>
    %c1_44 = arith.constant 1 : index
    %c0_45 = arith.constant 0 : index
    %46 = vector.load %arg7[%c1_44, %c0_45] : memref<3x32xf32, #tpu.memory_space<vmem>>, vector<1x32xf32>
    %47 = vector.broadcast %46 : vector<1x32xf32> to vector<8x32xf32>
    %48 = arith.addf %45, %47 : vector<8x32xf32>
    %cst_46 = arith.constant 0.000000e+00 : f32
    %49 = vector.broadcast %cst_46 : f32 to vector<8x32xf32>
    %50 = arith.maximumf %48, %49 : vector<8x32xf32>
    %51 = vector.extract_strided_slice %29 {offsets = [0, 64], sizes = [8, 32], strides = [1, 1]} : vector<8x96xf32> to vector<8x32xf32>
    %52 = vector.extract_strided_slice %34 {offsets = [0, 64], sizes = [8, 32], strides = [1, 1]} : vector<8x96xf32> to vector<8x32xf32>
    %53 = arith.addf %51, %52 : vector<8x32xf32>
    %c2_47 = arith.constant 2 : index
    %c0_48 = arith.constant 0 : index
    %54 = vector.load %arg7[%c2_47, %c0_48] : memref<3x32xf32, #tpu.memory_space<vmem>>, vector<1x32xf32>
    %55 = vector.broadcast %54 : vector<1x32xf32> to vector<8x32xf32>
    %56 = arith.addf %53, %55 : vector<8x32xf32>
    %cst_49 = arith.constant 0.000000e+00 : f32
    %57 = vector.broadcast %cst_49 : f32 to vector<8x32xf32>
    %58 = arith.maximumf %56, %57 : vector<8x32xf32>
    %c0_50 = arith.constant 0 : index
    %c0_51 = arith.constant 0 : index
    %c0_52 = arith.constant 0 : index
    %59 = vector.load %arg4[%c0_50, %c0_51, %c0_52] : memref<3x32x24xf32, #tpu.memory_space<vmem>>, vector<1x32x24xf32>
    %60 = vector.shape_cast %59 : vector<1x32x24xf32> to vector<32x24xf32>
    %cst_53 = arith.constant dense<0.000000e+00> : vector<8x24xf32>
    %61 = tpu.matmul %42, %60, %cst_53 {dimension_numbers = #tpu.dot_dimension_numbers<[1], [0], [0], [1], [0, 0, 1, 1], [], []>} : vector<8x32xf32>, vector<32x24xf32>, vector<8x24xf32> -> vector<8x24xf32>
    %cst_54 = arith.constant dense<0.000000e+00> : vector<8x24xf32>
    %62 = tpu.matmul %1, %61, %cst_54 {dimension_numbers = #tpu.dot_dimension_numbers<[1], [0], [0], [1], [0, 0, 1, 1], [], []>} : vector<8x8xf32>, vector<8x24xf32>, vector<8x24xf32> -> vector<8x24xf32>
    %c0_55 = arith.constant 0 : index
    %c0_56 = arith.constant 0 : index
    %63 = vector.load %arg6[%c0_55, %c0_56] : memref<3x24xf32, #tpu.memory_space<vmem>>, vector<1x24xf32>
    %64 = vector.broadcast %63 : vector<1x24xf32> to vector<8x24xf32>
    %65 = arith.mulf %62, %64 : vector<8x24xf32>
    %c1_57 = arith.constant 1 : index
    %c0_58 = arith.constant 0 : index
    %c0_59 = arith.constant 0 : index
    %66 = vector.load %arg4[%c1_57, %c0_58, %c0_59] : memref<3x32x24xf32, #tpu.memory_space<vmem>>, vector<1x32x24xf32>
    %67 = vector.shape_cast %66 : vector<1x32x24xf32> to vector<32x24xf32>
    %cst_60 = arith.constant dense<0.000000e+00> : vector<8x24xf32>
    %68 = tpu.matmul %50, %67, %cst_60 {dimension_numbers = #tpu.dot_dimension_numbers<[1], [0], [0], [1], [0, 0, 1, 1], [], []>} : vector<8x32xf32>, vector<32x24xf32>, vector<8x24xf32> -> vector<8x24xf32>
    %cst_61 = arith.constant dense<0.000000e+00> : vector<8x24xf32>
    %69 = tpu.matmul %3, %68, %cst_61 {dimension_numbers = #tpu.dot_dimension_numbers<[1], [0], [0], [1], [0, 0, 1, 1], [], []>} : vector<8x8xf32>, vector<8x24xf32>, vector<8x24xf32> -> vector<8x24xf32>
    %c1_62 = arith.constant 1 : index
    %c0_63 = arith.constant 0 : index
    %70 = vector.load %arg6[%c1_62, %c0_63] : memref<3x24xf32, #tpu.memory_space<vmem>>, vector<1x24xf32>
    %71 = vector.broadcast %70 : vector<1x24xf32> to vector<8x24xf32>
    %72 = arith.mulf %69, %71 : vector<8x24xf32>
    %73 = arith.addf %65, %72 : vector<8x24xf32>
    %c2_64 = arith.constant 2 : index
    %c0_65 = arith.constant 0 : index
    %c0_66 = arith.constant 0 : index
    %74 = vector.load %arg4[%c2_64, %c0_65, %c0_66] : memref<3x32x24xf32, #tpu.memory_space<vmem>>, vector<1x32x24xf32>
    %75 = vector.shape_cast %74 : vector<1x32x24xf32> to vector<32x24xf32>
    %cst_67 = arith.constant dense<0.000000e+00> : vector<8x24xf32>
    %76 = tpu.matmul %58, %75, %cst_67 {dimension_numbers = #tpu.dot_dimension_numbers<[1], [0], [0], [1], [0, 0, 1, 1], [], []>} : vector<8x32xf32>, vector<32x24xf32>, vector<8x24xf32> -> vector<8x24xf32>
    %cst_68 = arith.constant dense<0.000000e+00> : vector<8x24xf32>
    %77 = tpu.matmul %5, %76, %cst_68 {dimension_numbers = #tpu.dot_dimension_numbers<[1], [0], [0], [1], [0, 0, 1, 1], [], []>} : vector<8x8xf32>, vector<8x24xf32>, vector<8x24xf32> -> vector<8x24xf32>
    %c2_69 = arith.constant 2 : index
    %c0_70 = arith.constant 0 : index
    %78 = vector.load %arg6[%c2_69, %c0_70] : memref<3x24xf32, #tpu.memory_space<vmem>>, vector<1x24xf32>
    %79 = vector.broadcast %78 : vector<1x24xf32> to vector<8x24xf32>
    %80 = arith.mulf %77, %79 : vector<8x24xf32>
    %81 = arith.addf %73, %80 : vector<8x24xf32>
    %82 = vector.extract_strided_slice %61 {offsets = [0, 0], sizes = [8, 8], strides = [1, 1]} : vector<8x24xf32> to vector<8x8xf32>
    %83 = vector.extract_strided_slice %81 {offsets = [0, 0], sizes = [8, 8], strides = [1, 1]} : vector<8x24xf32> to vector<8x8xf32>
    %84 = arith.addf %82, %83 : vector<8x8xf32>
    %c0_71 = arith.constant 0 : index
    %c0_72 = arith.constant 0 : index
    %85 = vector.load %arg8[%c0_71, %c0_72] : memref<3x8xf32, #tpu.memory_space<vmem>>, vector<1x8xf32>
    %86 = vector.broadcast %85 : vector<1x8xf32> to vector<8x8xf32>
    %87 = arith.addf %84, %86 : vector<8x8xf32>
    %cst_73 = arith.constant 0.000000e+00 : f32
    %88 = vector.broadcast %cst_73 : f32 to vector<8x8xf32>
    %89 = arith.maximumf %87, %88 : vector<8x8xf32>
    %90 = vector.extract_strided_slice %68 {offsets = [0, 8], sizes = [8, 8], strides = [1, 1]} : vector<8x24xf32> to vector<8x8xf32>
    %91 = vector.extract_strided_slice %81 {offsets = [0, 8], sizes = [8, 8], strides = [1, 1]} : vector<8x24xf32> to vector<8x8xf32>
    %92 = arith.addf %90, %91 : vector<8x8xf32>
    %c1_74 = arith.constant 1 : index
    %c0_75 = arith.constant 0 : index
    %93 = vector.load %arg8[%c1_74, %c0_75] : memref<3x8xf32, #tpu.memory_space<vmem>>, vector<1x8xf32>
    %94 = vector.broadcast %93 : vector<1x8xf32> to vector<8x8xf32>
    %95 = arith.addf %92, %94 : vector<8x8xf32>
    %cst_76 = arith.constant 0.000000e+00 : f32
    %96 = vector.broadcast %cst_76 : f32 to vector<8x8xf32>
    %97 = arith.maximumf %95, %96 : vector<8x8xf32>
    %98 = arith.addf %89, %97 : vector<8x8xf32>
    %99 = vector.extract_strided_slice %76 {offsets = [0, 16], sizes = [8, 8], strides = [1, 1]} : vector<8x24xf32> to vector<8x8xf32>
    %100 = vector.extract_strided_slice %81 {offsets = [0, 16], sizes = [8, 8], strides = [1, 1]} : vector<8x24xf32> to vector<8x8xf32>
    %101 = arith.addf %99, %100 : vector<8x8xf32>
    %c2_77 = arith.constant 2 : index
    %c0_78 = arith.constant 0 : index
    %102 = vector.load %arg8[%c2_77, %c0_78] : memref<3x8xf32, #tpu.memory_space<vmem>>, vector<1x8xf32>
    %103 = vector.broadcast %102 : vector<1x8xf32> to vector<8x8xf32>
    %104 = arith.addf %101, %103 : vector<8x8xf32>
    %cst_79 = arith.constant 0.000000e+00 : f32
    %105 = vector.broadcast %cst_79 : f32 to vector<8x8xf32>
    %106 = arith.maximumf %104, %105 : vector<8x8xf32>
    %107 = arith.addf %98, %106 : vector<8x8xf32>
    %cst_80 = arith.constant 0.333333343 : f32
    %108 = vector.broadcast %cst_80 : f32 to vector<8x8xf32>
    %109 = arith.mulf %107, %108 : vector<8x8xf32>
    %110 = math.absf %109 : vector<8x8xf32>
    %c0_81 = arith.constant 0 : index
    %c0_82 = arith.constant 0 : index
    %c0_83 = arith.constant 0 : index
    %111 = vector.load %arg9[%c0_81, %c0_82, %c0_83] : memref<1x8x8xf32, #tpu.memory_space<vmem>>, vector<1x8x8xf32>
    %112 = vector.shape_cast %111 : vector<1x8x8xf32> to vector<8x8xf32>
    %113 = vector.shape_cast %110 : vector<8x8xf32> to vector<1x8x8xf32>
    tpu.vector_store %arg9[%c0_81, %c0_82, %c0_83], %113 {strides = array<i32>} : memref<1x8x8xf32, #tpu.memory_space<vmem>>, vector<1x8x8xf32>,
    return
  }
  func.func @transform_0(%arg0: i32) -> (i32, i32, i32, i32) {
    %c0_i32 = arith.constant 0 : i32
    %c0_i32_0 = arith.constant 0 : i32
    %c0_i32_1 = arith.constant 0 : i32
    %c0_i32_2 = arith.constant 0 : i32
    return %arg0, %c0_i32, %c0_i32_0, %c0_i32_1 : i32, i32, i32, i32
  }
  func.func @transform_1(%arg0: i32) -> (i32, i32, i32, i32) {
    %c0_i32 = arith.constant 0 : i32
    %c0_i32_0 = arith.constant 0 : i32
    %c0_i32_1 = arith.constant 0 : i32
    %c0_i32_2 = arith.constant 0 : i32
    return %arg0, %c0_i32, %c0_i32_0, %c0_i32_1 : i32, i32, i32, i32
  }
  func.func @transform_2(%arg0: i32) -> (i32, i32, i32) {
    %c0_i32 = arith.constant 0 : i32
    %c0_i32_0 = arith.constant 0 : i32
    %c0_i32_1 = arith.constant 0 : i32
    %c0_i32_2 = arith.constant 0 : i32
    return %c0_i32, %c0_i32_0, %c0_i32_1 : i32, i32, i32
  }
  func.func @transform_3(%arg0: i32) -> (i32, i32, i32) {
    %c0_i32 = arith.constant 0 : i32
    %c0_i32_0 = arith.constant 0 : i32
    %c0_i32_1 = arith.constant 0 : i32
    %c0_i32_2 = arith.constant 0 : i32
    return %c0_i32, %c0_i32_0, %c0_i32_1 : i32, i32, i32
  }
  func.func @transform_4(%arg0: i32) -> (i32, i32) {
    %c0_i32 = arith.constant 0 : i32
    %c0_i32_0 = arith.constant 0 : i32
    %c0_i32_1 = arith.constant 0 : i32
    return %c0_i32, %c0_i32_0 : i32, i32
  }
  func.func @transform_5(%arg0: i32) -> (i32, i32) {
    %c0_i32 = arith.constant 0 : i32
    %c0_i32_0 = arith.constant 0 : i32
    %c0_i32_1 = arith.constant 0 : i32
    return %c0_i32, %c0_i32_0 : i32, i32
  }
  func.func @transform_6(%arg0: i32) -> (i32, i32) {
    %c0_i32 = arith.constant 0 : i32
    %c0_i32_0 = arith.constant 0 : i32
    %c0_i32_1 = arith.constant 0 : i32
    return %c0_i32, %c0_i32_0 : i32, i32
  }
  func.func @transform_7(%arg0: i32) -> (i32, i32) {
    %c0_i32 = arith.constant 0 : i32
    %c0_i32_0 = arith.constant 0 : i32
    %c0_i32_1 = arith.constant 0 : i32
    return %c0_i32, %c0_i32_0 : i32, i32
  }
  func.func @transform_8(%arg0: i32) -> (i32, i32, i32) {
    %c0_i32 = arith.constant 0 : i32
    %c0_i32_0 = arith.constant 0 : i32
    %c0_i32_1 = arith.constant 0 : i32
    return %arg0, %c0_i32, %c0_i32_0 : i32, i32, i32
  }
}

</mosaic_0001>

<llo_original>
// kernel: pred_forward_batched.1
$region0: #{pred_forward_batched.1}
  #allocation0 [shape = 'u32[]', space=smem, size = 0x4, offset = 0x4, fixed_abs, tag = 'smem constant byte address 0x4 - core index']
  #allocation1 [shape = 'u32[144,128]{1,0:T(1,128)}', space=vmem, size = 0x12000, scoped, tag = 'internal scratch']
  %s0 = inlined_call_operand.vmem [shape: f32[2,3,8,16], index: 0, kind: input, shape index: {}]
  %s1 = inlined_call_operand.vmem [shape: f32[2,3,8,8], index: 1, kind: input, shape index: {}]
  %s2 = inlined_call_operand.vmem [shape: f32[3,16,96], index: 2, kind: input, shape index: {}]
  %s3 = inlined_call_operand.vmem [shape: f32[3,32,24], index: 3, kind: input, shape index: {}]
  %s4 = inlined_call_operand.vmem [shape: f32[3,96], index: 4, kind: input, shape index: {}]
  %s5 = inlined_call_operand.vmem [shape: f32[3,24], index: 5, kind: input, shape index: {}]
  %s6 = inlined_call_operand.vmem [shape: f32[3,32], index: 6, kind: input, shape index: {}]
  %s7 = inlined_call_operand.vmem [shape: f32[3,8], index: 7, kind: input, shape index: {}]
  %s8 = inlined_call_operand.hbm [shape: f32[2,8,8], index: 8, kind: output, shape index: {}]
  %s9 = sld [smem:[#allocation0]]
  $region65: #{pred_forward_batched.1} parent=0
    _
  %s11 = ssub.s32 1, %s9
  %s12 = scalar_select 0, %s11, %s9
  $region1: #{pred_forward_batched.1} parent=0
    #allocation2 [shape = 'u8[8192]{0}', space=vmem, size = 0x2000, scoped, tag = 'output window, operand 0']
    #allocation3 [shape = 's32[2]{0}', space=sflag, size = 0x8, scoped, tag = 'scoped memory for pred_forward_batched.1']
    %13 = vsyncpa [#allocation3], 0
    %s14 = scalar_lea.sflag [#allocation3], 1
    %15 = vsyncpa %s14, 0
    loop: start=0, step=1, limit=4
    $region2: #{pred_forward_batched.1} parent=1 // loop_pre_header
      _
    $region3: #{pred_forward_batched.1} parent=1 // loop_header
      %s17 = sphi 0, %s21
      %p18 = scmp.ge.s32.totalorder %s17, 4
      %s27 = sphi 0, %s29
      %s30 = sphi 0, %s27
      %s31 = sphi 0, %s30
      %s47 = sphi 0, %s31
      %s53 = sphi 0, %s55
      %s56 = sphi 0, %s53
      %s57 = sphi 0, %s56
      %s73 = sphi 0, %s57
      %s77 = sphi 0, %s77
      %s79 = sphi 0, %s77
      %s80 = sphi 0, %s79
      %s94 = sphi 0, %s80
      %s98 = sphi 0, %s98
      %s100 = sphi 0, %s98
      %s101 = sphi 0, %s100
      %s115 = sphi 0, %s101
      %s119 = sphi 0, %s119
      %s121 = sphi 0, %s119
      %s122 = sphi 0, %s121
      %s136 = sphi 0, %s122
      %s140 = sphi 0, %s140
      %s142 = sphi 0, %s140
      %s143 = sphi 0, %s142
      %s157 = sphi 0, %s143
      %s161 = sphi 0, %s161
      %s163 = sphi 0, %s161
      %s164 = sphi 0, %s163
      %s178 = sphi 0, %s164
      %s182 = sphi 0, %s182
      %s184 = sphi 0, %s182
      %s185 = sphi 0, %s184
      %s199 = sphi 0, %s185
      %s205 = sphi 0, %s207
      %s208 = sphi 0, %s205
      %s209 = sphi 0, %s208
      %s225 = sphi 0, %s209
    $region4: #{pred_forward_batched.1} parent=1 // loop_header_branch
      %20 = sbr.rel (%p18) target = $region8
    $region5: #{pred_forward_batched.1} parent=1 // loop_body
      %s22 = ssub.s32 %s17, 1
      %s23 = ssub.s32 %s17, 2
      %s24 = sadd.s32 %s17, 1
      %s25 = ssub.s32 %s17, %s24
      %p26 = scmp.eq.s32.totalorder %s25, 0
      %s28 = sadd.s32 %s27, 1
      %s29 = scalar_select %p26, %s27, %s28
      %p32 = pneg %p26
      %p33 = scmp.eq.s32.totalorder %s17, 1
      %p34 = por %p32, %p33
      %p35 = scmp.ne.s32.totalorder %s27, %s30
      %p36 = scmp.eq.s32.totalorder %s17, 0
      %p37 = por %p35, %p36
      %p38 = scmp.ne.s32.totalorder %s27, %s30
      %p39 = scmp.eq.s32.totalorder %s22, 1
      %p40 = por %p38, %p39
      %p41 = scmp.ne.s32.totalorder %s30, %s31
      %p42 = scmp.eq.s32.totalorder %s22, 0
      %p43 = por %p41, %p42
      %p44 = scmp.ne.s32.totalorder %s30, %s31
      %p45 = scmp.eq.s32.totalorder %s23, 1
      %p46 = por %p44, %p45
      %p48 = scmp.ne.s32.totalorder %s31, %s47
      %p49 = scmp.eq.s32.totalorder %s23, 0
      %p50 = por %p48, %p49
      %s51 = ssub.s32 %s17, %s24
      %p52 = scmp.eq.s32.totalorder %s51, 0
      %s54 = sadd.s32 %s53, 1
      %s55 = scalar_select %p52, %s53, %s54
      %p58 = pneg %p52
      %p59 = scmp.eq.s32.totalorder %s17, 1
      %p60 = por %p58, %p59
      %p61 = scmp.ne.s32.totalorder %s53, %s56
      %p62 = scmp.eq.s32.totalorder %s17, 0
      %p63 = por %p61, %p62
      %p64 = scmp.ne.s32.totalorder %s53, %s56
      %p65 = scmp.eq.s32.totalorder %s22, 1
      %p66 = por %p64, %p65
      %p67 = scmp.ne.s32.totalorder %s56, %s57
      %p68 = scmp.eq.s32.totalorder %s22, 0
      %p69 = por %p67, %p68
      %p70 = scmp.ne.s32.totalorder %s56, %s57
      %p71 = scmp.eq.s32.totalorder %s23, 1
      %p72 = por %p70, %p71
      %p74 = scmp.ne.s32.totalorder %s57, %s73
      %p75 = scmp.eq.s32.totalorder %s23, 0
      %p76 = por %p74, %p75
      %s78 = sadd.s32 %s77, 1
      %p81 = scmp.eq.s32.totalorder %s17, 1
      %p82 = scmp.ne.s32.totalorder %s77, %s79
      %p83 = scmp.eq.s32.totalorder %s17, 0
      %p84 = por %p82, %p83
      %p85 = scmp.ne.s32.totalorder %s77, %s79
      %p86 = scmp.eq.s32.totalorder %s22, 1
      %p87 = por %p85, %p86
      %p88 = scmp.ne.s32.totalorder %s79, %s80
      %p89 = scmp.eq.s32.totalorder %s22, 0
      %p90 = por %p88, %p89
      %p91 = scmp.ne.s32.totalorder %s79, %s80
      %p92 = scmp.eq.s32.totalorder %s23, 1
      %p93 = por %p91, %p92
      %p95 = scmp.ne.s32.totalorder %s80, %s94
      %p96 = scmp.eq.s32.totalorder %s23, 0
      %p97 = por %p95, %p96
      %s99 = sadd.s32 %s98, 1
      %p102 = scmp.eq.s32.totalorder %s17, 1
      %p103 = scmp.ne.s32.totalorder %s98, %s100
      %p104 = scmp.eq.s32.totalorder %s17, 0
      %p105 = por %p103, %p104
      %p106 = scmp.ne.s32.totalorder %s98, %s100
      %p107 = scmp.eq.s32.totalorder %s22, 1
      %p108 = por %p106, %p107
      %p109 = scmp.ne.s32.totalorder %s100, %s101
      %p110 = scmp.eq.s32.totalorder %s22, 0
      %p111 = por %p109, %p110
      %p112 = scmp.ne.s32.totalorder %s100, %s101
      %p113 = scmp.eq.s32.totalorder %s23, 1
      %p114 = por %p112, %p113
      %p116 = scmp.ne.s32.totalorder %s101, %s115
      %p117 = scmp.eq.s32.totalorder %s23, 0
      %p118 = por %p116, %p117
      %s120 = sadd.s32 %s119, 1
      %p123 = scmp.eq.s32.totalorder %s17, 1
      %p124 = scmp.ne.s32.totalorder %s119, %s121
      %p125 = scmp.eq.s32.totalorder %s17, 0
      %p126 = por %p124, %p125
      %p127 = scmp.ne.s32.totalorder %s119, %s121
      %p128 = scmp.eq.s32.totalorder %s22, 1
      %p129 = por %p127, %p128
      %p130 = scmp.ne.s32.totalorder %s121, %s122
      %p131 = scmp.eq.s32.totalorder %s22, 0
      %p132 = por %p130, %p131
      %p133 = scmp.ne.s32.totalorder %s121, %s122
      %p134 = scmp.eq.s32.totalorder %s23, 1
      %p135 = por %p133, %p134
      %p137 = scmp.ne.s32.totalorder %s122, %s136
      %p138 = scmp.eq.s32.totalorder %s23, 0
      %p139 = por %p137, %p138
      %s141 = sadd.s32 %s140, 1
      %p144 = scmp.eq.s32.totalorder %s17, 1
      %p145 = scmp.ne.s32.totalorder %s140, %s142
      %p146 = scmp.eq.s32.totalorder %s17, 0
      %p147 = por %p145, %p146
      %p148 = scmp.ne.s32.totalorder %s140, %s142
      %p149 = scmp.eq.s32.totalorder %s22, 1
      %p150 = por %p148, %p149
      %p151 = scmp.ne.s32.totalorder %s142, %s143
      %p152 = scmp.eq.s32.totalorder %s22, 0
      %p153 = por %p151, %p152
      %p154 = scmp.ne.s32.totalorder %s142, %s143
      %p155 = scmp.eq.s32.totalorder %s23, 1
      %p156 = por %p154, %p155
      %p158 = scmp.ne.s32.totalorder %s143, %s157
      %p159 = scmp.eq.s32.totalorder %s23, 0
      %p160 = por %p158, %p159
      %s162 = sadd.s32 %s161, 1
      %p165 = scmp.eq.s32.totalorder %s17, 1
      %p166 = scmp.ne.s32.totalorder %s161, %s163
      %p167 = scmp.eq.s32.totalorder %s17, 0
      %p168 = por %p166, %p167
      %p169 = scmp.ne.s32.totalorder %s161, %s163
      %p170 = scmp.eq.s32.totalorder %s22, 1
      %p171 = por %p169, %p170
      %p172 = scmp.ne.s32.totalorder %s163, %s164
      %p173 = scmp.eq.s32.totalorder %s22, 0
      %p174 = por %p172, %p173
      %p175 = scmp.ne.s32.totalorder %s163, %s164
      %p176 = scmp.eq.s32.totalorder %s23, 1
      %p177 = por %p175, %p176
      %p179 = scmp.ne.s32.totalorder %s164, %s178
      %p180 = scmp.eq.s32.totalorder %s23, 0
      %p181 = por %p179, %p180
      %s183 = sadd.s32 %s182, 1
      %p186 = scmp.eq.s32.totalorder %s17, 1
      %p187 = scmp.ne.s32.totalorder %s182, %s184
      %p188 = scmp.eq.s32.totalorder %s17, 0
      %p189 = por %p187, %p188
      %p190 = scmp.ne.s32.totalorder %s182, %s184
      %p191 = scmp.eq.s32.totalorder %s22, 1
      %p192 = por %p190, %p191
      %p193 = scmp.ne.s32.totalorder %s184, %s185
      %p194 = scmp.eq.s32.totalorder %s22, 0
      %p195 = por %p193, %p194
      %p196 = scmp.ne.s32.totalorder %s184, %s185
      %p197 = scmp.eq.s32.totalorder %s23, 1
      %p198 = por %p196, %p197
      %p200 = scmp.ne.s32.totalorder %s185, %s199
      %p201 = scmp.eq.s32.totalorder %s23, 0
      %p202 = por %p200, %p201
      %s203 = ssub.s32 %s17, %s24
      %p204 = scmp.eq.s32.totalorder %s203, 0
      %s206 = sadd.s32 %s205, 1
      %s207 = scalar_select %p204, %s205, %s206
      %p210 = pneg %p204
      %p211 = scmp.eq.s32.totalorder %s17, 1
      %p212 = por %p210, %p211
      %p213 = scmp.ne.s32.totalorder %s205, %s208
      %p214 = scmp.eq.s32.totalorder %s17, 0
      %p215 = por %p213, %p214
      %p216 = scmp.ne.s32.totalorder %s205, %s208
      %p217 = scmp.eq.s32.totalorder %s22, 1
      %p218 = por %p216, %p217
      %p219 = scmp.ne.s32.totalorder %s208, %s209
      %p220 = scmp.eq.s32.totalorder %s22, 0
      %p221 = por %p219, %p220
      %p222 = scmp.ne.s32.totalorder %s208, %s209
      %p223 = scmp.eq.s32.totalorder %s23, 1
      %p224 = por %p222, %p223
      %p226 = scmp.ne.s32.totalorder %s209, %s225
      %p227 = scmp.eq.s32.totalorder %s23, 0
      %p228 = por %p226, %p227
      %p229 = scmp.le.s32.totalorder 1, %s17
      %p230 = scmp.lt.s32.totalorder %s17, 3
      %p231 = pnand %p229, %p230
      %p232 = pneg %p231
      // Predicated region
      $region9: #{pred_forward_batched.1} parent=5 // pred_check
        _
      $region10: #{pred_forward_batched.1} parent=5 // pred_check_branch
        %234 = sbr.rel (%p231) target = $region12
      $region11: #{pred_forward_batched.1} parent=5 // pred_region
        %s235 = ssub.s32 %s17, 1
        // Predicated region
        $region13: #{pred_forward_batched.1} parent=11 // pred_check
          %p236 = pneg %p90
        $region14: #{pred_forward_batched.1} parent=11 // pred_check_branch
          %238 = sbr.rel (%p236) target = $region16
        $region15: #{pred_forward_batched.1} parent=11 // pred_region
          _
        $region16: #{pred_forward_batched.1} parent=11 // pred_fallthru
          _
        // Predicated region
        $region17: #{pred_forward_batched.1} parent=11 // pred_check
          %p239 = pneg %p111
        $region18: #{pred_forward_batched.1} parent=11 // pred_check_branch
          %241 = sbr.rel (%p239) target = $region20
        $region19: #{pred_forward_batched.1} parent=11 // pred_region
          _
        $region20: #{pred_forward_batched.1} parent=11 // pred_fallthru
          _
        // Predicated region
        $region21: #{pred_forward_batched.1} parent=11 // pred_check
          %p242 = pneg %p132
        $region22: #{pred_forward_batched.1} parent=11 // pred_check_branch
          %244 = sbr.rel (%p242) target = $region24
        $region23: #{pred_forward_batched.1} parent=11 // pred_region
          _
        $region24: #{pred_forward_batched.1} parent=11 // pred_fallthru
          _
        // Predicated region
        $region25: #{pred_forward_batched.1} parent=11 // pred_check
          %p245 = pneg %p153
        $region26: #{pred_forward_batched.1} parent=11 // pred_check_branch
          %247 = sbr.rel (%p245) target = $region28
        $region27: #{pred_forward_batched.1} parent=11 // pred_region
          _
        $region28: #{pred_forward_batched.1} parent=11 // pred_fallthru
          _
        // Predicated region
        $region29: #{pred_forward_batched.1} parent=11 // pred_check
          %p248 = pneg %p174
        $region30: #{pred_forward_batched.1} parent=11 // pred_check_branch
          %250 = sbr.rel (%p248) target = $region32
        $region31: #{pred_forward_batched.1} parent=11 // pred_region
          _
        $region32: #{pred_forward_batched.1} parent=11 // pred_fallthru
          _
        // Predicated region
        $region33: #{pred_forward_batched.1} parent=11 // pred_check
          %p251 = pneg %p195
        $region34: #{pred_forward_batched.1} parent=11 // pred_check_branch
          %253 = sbr.rel (%p251) target = $region36
        $region35: #{pred_forward_batched.1} parent=11 // pred_region
          _
        $region36: #{pred_forward_batched.1} parent=11 // pred_fallthru
          _
      $region12: #{pred_forward_batched.1} parent=5 // pred_fallthru
        _
      %p254 = scmp.lt.s32.totalorder %s17, 2
      // Predicated region
      $region37: #{pred_forward_batched.1} parent=5 // pred_check
        %p255 = pneg %p254
      $region38: #{pred_forward_batched.1} parent=5 // pred_check_branch
        %257 = sbr.rel (%p255) target = $region40
      $region39: #{pred_forward_batched.1} parent=5 // pred_region
        // Predicated region
        $region41: #{pred_forward_batched.1} parent=39 // pred_check
          %p258 = pneg %p37
        $region42: #{pred_forward_batched.1} parent=39 // pred_check_branch
          %260 = sbr.rel (%p258) target = $region44
        $region43: #{pred_forward_batched.1} parent=39 // pred_region
          %p261 = scmp.lt.s32.totalorder %s17, 1
          %s262 = scalar_select %p261, %s17, 1
          %s263 = smul.addr %s262, 3
          %s264 = smul.addr %s263, 8
          %s265 = scalar_lea.vmem %s0, %s264
        $region44: #{pred_forward_batched.1} parent=39 // pred_fallthru
          _
        // Predicated region
        $region45: #{pred_forward_batched.1} parent=39 // pred_check
          %p266 = pneg %p63
        $region46: #{pred_forward_batched.1} parent=39 // pred_check_branch
          %268 = sbr.rel (%p266) target = $region48
        $region47: #{pred_forward_batched.1} parent=39 // pred_region
          %p269 = scmp.lt.s32.totalorder %s17, 1
          %s270 = scalar_select %p269, %s17, 1
          %s271 = smul.addr %s270, 3
          %s272 = smul.addr %s271, 8
          %s273 = scalar_lea.vmem %s1, %s272
        $region48: #{pred_forward_batched.1} parent=39 // pred_fallthru
          _
      $region40: #{pred_forward_batched.1} parent=5 // pred_fallthru
        _
      %p274 = scmp.le.s32.totalorder 1, %s17
      %p275 = scmp.lt.s32.totalorder %s17, 3
      %p276 = pnand %p274, %p275
      %p277 = pneg %p276
      // Predicated region
      $region49: #{pred_forward_batched.1} parent=5 // pred_check
        _
      $region50: #{pred_forward_batched.1} parent=5 // pred_check_branch
        %279 = sbr.rel (%p276) target = $region52
      $region51: #{pred_forward_batched.1} parent=5 // pred_region
        %s280 = ssub.s32 %s17, 1
        %p281 = scmp.lt.s32.totalorder %s22, 1
        %s282 = scalar_select %p281, %s22, 1
        %s283 = smul.addr %s282, 3
        %s284 = smul.addr %s283, 8
        %s285 = scalar_lea.vmem %s0, %s284
        %p286 = pneg %p43
        %p287 = pneg %p40
        %p288 = scmp.lt.s32.totalorder %s22, 1
        %s289 = scalar_select %p288, %s22, 1
        %s290 = smul.addr %s289, 3
        %s291 = smul.addr %s290, 8
        %s292 = scalar_lea.vmem %s1, %s291
        %p293 = pneg %p69
        %p294 = pneg %p66
        %p295 = pneg %p90
        %p296 = pneg %p87
        %p297 = pneg %p111
        %p298 = pneg %p108
        %p299 = pneg %p132
        %p300 = pneg %p129
        %p301 = pneg %p153
        %p302 = pneg %p150
        %p303 = pneg %p174
        %p304 = pneg %p171
        %p305 = pneg %p195
        %p306 = pneg %p192
        %p307 = pneg %p221
        %p308 = pneg %p218
        %s309 = sand.u32 %s208, 1
        %s310 = scalar_lea.sflag [#allocation3], %s309
        %s311 = sand.u32 %s208, 1
        %s312 = smul.addr %s311, 8
        %s313 = scalar_lea.vmem [#allocation2], %s312
        %p314 = scmp.lt.s32.totalorder %s22, 1
        %s315 = scalar_select %p314, %s22, 1
        %s316 = smul.addr %s315, 3
        %s317 = smul.addr %s316, 8
        %s318 = scalar_lea.vmem %s0, %s317
        %p319 = scmp.lt.s32.totalorder %s22, 1
        %s320 = scalar_select %p319, %s22, 1
        %s321 = smul.addr %s320, 3
        %s322 = smul.addr %s321, 8
        %s323 = scalar_lea.vmem %s1, %s322
        %v324 = vld [vmem:[%s323] sm:$0xff]
        %s325 = scalar_lea.vmem %s323, 8
        %v326 = vld [vmem:[%s325] sm:$0xff]
        %s327 = scalar_lea.vmem %s323, 16
        %v328 = vld [vmem:[%s327] sm:$0xff]
        %v329 = vld [vmem:[%s318] sm:$0xff]
        %v330 = vld [vmem:[%s2] sm:$0xff]
        %v331 = vld [vmem:[%s2 + $0x8] sm:$0xff]
        %vm332 = vcmask 130048
        %v334 = vsel %vm332, %v329, 0
        %336 = vmatprep.subr.mxu0 0.0
        %337 = vmatpush1.msra.mxu0 %v330
        %338 = vmatprep.subr.mxu0 0.0
        %339 = vmatpush1.msra.mxu0 %v331
        %340 = vmatprep.subr.mxu0 0.0
        %341 = vmatpush1.msra.mxu0 0.0
        %342 = vmatprep.subr.mxu0 0.0
        %343 = vmatpush1.msra.mxu0 0.0
        %344 = vmatprep.subr.mxu0 0.0
        %345 = vmatpush1.msra.mxu0 0.0
        %346 = vmatprep.subr.mxu0 0.0
        %347 = vmatpush1.msra.mxu0 0.0
        %348 = vmatprep.subr.mxu0 0.0
        %349 = vmatpush1.msra.mxu0 0.0
        %350 = vmatprep.subr.mxu0 0.0
        %351 = vmatpush1.msra.mxu0 0.0
        %352 = vmatprep.subr.mxu0 0.0
        %353 = vmatpush1.msra.mxu0 0.0
        %354 = vmatprep.subr.mxu0 0.0
        %355 = vmatpush1.msra.mxu0 0.0
        %356 = vmatprep.subr.mxu0 0.0
        %357 = vmatpush1.msra.mxu0 0.0
        %358 = vmatprep.subr.mxu0 0.0
        %359 = vmatpush1.msra.mxu0 0.0
        %360 = vmatprep.subr.mxu0 0.0
        %361 = vmatpush1.msra.mxu0 0.0
        %362 = vmatprep.subr.mxu0 0.0
        %363 = vmatpush1.msra.mxu0 0.0
        %364 = vmatprep.subr.mxu0 0.0
        %365 = vmatpush1.msra.mxu0 0.0
        %366 = vmatprep.subr.mxu0 0.0
        %367 = vmatpush1.msra.mxu0 0.0
        %368 = vmatprep.subr.mxu0 0.0
        %369 = vmatpush1.msra.mxu0 0.0
        %370 = vmatprep.subr.mxu0 0.0
        %371 = vmatpush1.msra.mxu0 0.0
        %372 = vmatprep.subr.mxu0 0.0
        %373 = vmatpush1.msra.mxu0 0.0
        %374 = vmatprep.subr.mxu0 0.0
        %375 = vmatpush1.msra.mxu0 0.0
        %376 = vmatprep.subr.mxu0 0.0
        %377 = vmatpush1.msra.mxu0 0.0
        %378 = vmatprep.subr.mxu0 0.0
        %379 = vmatpush1.msra.mxu0 0.0
        %380 = vmatprep.subr.mxu0 0.0
        %381 = vmatpush1.msra.mxu0 0.0
        %382 = vmatprep.subr.mxu0 0.0
        %383 = vmatpush1.msra.mxu0 0.0
        %384 = vmatprep.subr.mxu0 0.0
        %385 = vmatpush1.msra.mxu0 0.0
        %386 = vmatprep.subr.mxu0 0.0
        %387 = vmatpush1.msra.mxu0 0.0
        %388 = vmatprep.subr.mxu0 0.0
        %389 = vmatpush1.msra.mxu0 0.0
        %390 = vmatprep.subr.mxu0 0.0
        %391 = vmatpush1.msra.mxu0 0.0
        %392 = vmatprep.subr.mxu0 0.0
        %393 = vmatpush1.msra.mxu0 0.0
        %394 = vmatprep.subr.mxu0 0.0
        %395 = vmatpush1.msra.mxu0 0.0
        %396 = vmatprep.subr.mxu0 0.0
        %397 = vmatpush1.msra.mxu0 0.0
        %398 = vmatprep.subr.mxu0 0.0
        %399 = vmatpush1.msra.mxu0 0.0
        %400 = vmatprep.mubr.f32.mxu0 0.0
        %401 = vmatmul.mubr.f32.gmra.mrb[0].mxu0 %v334
        %v402 = vpop.f32.mrb[0].mxu0
        %v403 = vadd.f32 0.0, %v402
        %v404 = vpop.f32.mrb[0].mxu0
        %405 = vdwg.mxu0
        %vm406 = vcmask 64512
        %v408 = vsel %vm406, %v324, 0
        %410 = vmatprep.subr.mxu0 0.0
        %411 = vmatpush1.msra.mxu0 %v403
        %412 = vmatprep.subr.mxu0 0.0
        %413 = vmatpush1.msra.mxu0 0.0
        %414 = vmatprep.subr.mxu0 0.0
        %415 = vmatpush1.msra.mxu0 0.0
        %416 = vmatprep.subr.mxu0 0.0
        %417 = vmatpush1.msra.mxu0 0.0
        %418 = vmatprep.subr.mxu0 0.0
        %419 = vmatpush1.msra.mxu0 0.0
        %420 = vmatprep.subr.mxu0 0.0
        %421 = vmatpush1.msra.mxu0 0.0
        %422 = vmatprep.subr.mxu0 0.0
        %423 = vmatpush1.msra.mxu0 0.0
        %424 = vmatprep.subr.mxu0 0.0
        %425 = vmatpush1.msra.mxu0 0.0
        %426 = vmatprep.subr.mxu0 0.0
        %427 = vmatpush1.msra.mxu0 0.0
        %428 = vmatprep.subr.mxu0 0.0
        %429 = vmatpush1.msra.mxu0 0.0
        %430 = vmatprep.subr.mxu0 0.0
        %431 = vmatpush1.msra.mxu0 0.0
        %432 = vmatprep.subr.mxu0 0.0
        %433 = vmatpush1.msra.mxu0 0.0
        %434 = vmatprep.subr.mxu0 0.0
        %435 = vmatpush1.msra.mxu0 0.0
        %436 = vmatprep.subr.mxu0 0.0
        %437 = vmatpush1.msra.mxu0 0.0
        %438 = vmatprep.subr.mxu0 0.0
        %439 = vmatpush1.msra.mxu0 0.0
        %440 = vmatprep.subr.mxu0 0.0
        %441 = vmatpush1.msra.mxu0 0.0
        %442 = vmatprep.subr.mxu0 0.0
        %443 = vmatpush1.msra.mxu0 0.0
        %444 = vmatprep.subr.mxu0 0.0
        %445 = vmatpush1.msra.mxu0 0.0
        %446 = vmatprep.subr.mxu0 0.0
        %447 = vmatpush1.msra.mxu0 0.0
        %448 = vmatprep.subr.mxu0 0.0
        %449 = vmatpush1.msra.mxu0 0.0
        %450 = vmatprep.subr.mxu0 0.0
        %451 = vmatpush1.msra.mxu0 0.0
        %452 = vmatprep.subr.mxu0 0.0
        %453 = vmatpush1.msra.mxu0 0.0
        %454 = vmatprep.subr.mxu0 0.0
        %455 = vmatpush1.msra.mxu0 0.0
        %456 = vmatprep.subr.mxu0 0.0
        %457 = vmatpush1.msra.mxu0 0.0
        %458 = vmatprep.subr.mxu0 0.0
        %459 = vmatpush1.msra.mxu0 0.0
        %460 = vmatprep.subr.mxu0 0.0
        %461 = vmatpush1.msra.mxu0 0.0
        %462 = vmatprep.subr.mxu0 0.0
        %463 = vmatpush1.msra.mxu0 0.0
        %464 = vmatprep.subr.mxu0 0.0
        %465 = vmatpush1.msra.mxu0 0.0
        %466 = vmatprep.subr.mxu0 0.0
        %467 = vmatpush1.msra.mxu0 0.0
        %468 = vmatprep.subr.mxu0 0.0
        %469 = vmatpush1.msra.mxu0 0.0
        %470 = vmatprep.subr.mxu0 0.0
        %471 = vmatpush1.msra.mxu0 0.0
        %472 = vmatprep.subr.mxu0 0.0
        %473 = vmatpush1.msra.mxu0 0.0
        %474 = vmatprep.mubr.f32.mxu0 0.0
        %475 = vmatmul.mubr.f32.gmra.mrb[0].mxu0 %v408
        %v476 = vpop.f32.mrb[0].mxu0
        %v477 = vadd.f32 0.0, %v476
        %v478 = vpop.f32.mrb[0].mxu0
        %479 = vdwg.mxu0
        %v480 = vld [vmem:[%s4] sm:$0x1]
        %v481 = vlaneseq
        %v482 = vshrl.u32 %v481, 7
        %v483 = vsub.s32 0, %v482
        %v484 = vrot.slane %v480, %v483
        %v485 = vmul.f32 %v477, %v484
        %s486 = scalar_lea.vmem %s318, 8
        %v487 = vld [vmem:[%s486] sm:$0xff]
        %s488 = scalar_lea.vmem %s2, 16
        %v489 = vld [vmem:[%s488] sm:$0xff]
        %v490 = vld [vmem:[%s488 + $0x8] sm:$0xff]
        %v492 = vsel %vm332, %v487, 0
        %494 = vmatprep.subr.mxu0 0.0
        %495 = vmatpush1.msra.mxu0 %v489
        %496 = vmatprep.subr.mxu0 0.0
        %497 = vmatpush1.msra.mxu0 %v490
        %498 = vmatprep.subr.mxu0 0.0
        %499 = vmatpush1.msra.mxu0 0.0
        %500 = vmatprep.subr.mxu0 0.0
        %501 = vmatpush1.msra.mxu0 0.0
        %502 = vmatprep.subr.mxu0 0.0
        %503 = vmatpush1.msra.mxu0 0.0
        %504 = vmatprep.subr.mxu0 0.0
        %505 = vmatpush1.msra.mxu0 0.0
        %506 = vmatprep.subr.mxu0 0.0
        %507 = vmatpush1.msra.mxu0 0.0
        %508 = vmatprep.subr.mxu0 0.0
        %509 = vmatpush1.msra.mxu0 0.0
        %510 = vmatprep.subr.mxu0 0.0
        %511 = vmatpush1.msra.mxu0 0.0
        %512 = vmatprep.subr.mxu0 0.0
        %513 = vmatpush1.msra.mxu0 0.0
        %514 = vmatprep.subr.mxu0 0.0
        %515 = vmatpush1.msra.mxu0 0.0
        %516 = vmatprep.subr.mxu0 0.0
        %517 = vmatpush1.msra.mxu0 0.0
        %518 = vmatprep.subr.mxu0 0.0
        %519 = vmatpush1.msra.mxu0 0.0
        %520 = vmatprep.subr.mxu0 0.0
        %521 = vmatpush1.msra.mxu0 0.0
        %522 = vmatprep.subr.mxu0 0.0
        %523 = vmatpush1.msra.mxu0 0.0
        %524 = vmatprep.subr.mxu0 0.0
        %525 = vmatpush1.msra.mxu0 0.0
        %526 = vmatprep.subr.mxu0 0.0
        %527 = vmatpush1.msra.mxu0 0.0
        %528 = vmatprep.subr.mxu0 0.0
        %529 = vmatpush1.msra.mxu0 0.0
        %530 = vmatprep.subr.mxu0 0.0
        %531 = vmatpush1.msra.mxu0 0.0
        %532 = vmatprep.subr.mxu0 0.0
        %533 = vmatpush1.msra.mxu0 0.0
        %534 = vmatprep.subr.mxu0 0.0
        %535 = vmatpush1.msra.mxu0 0.0
        %536 = vmatprep.subr.mxu0 0.0
        %537 = vmatpush1.msra.mxu0 0.0
        %538 = vmatprep.subr.mxu0 0.0
        %539 = vmatpush1.msra.mxu0 0.0
        %540 = vmatprep.subr.mxu0 0.0
        %541 = vmatpush1.msra.mxu0 0.0
        %542 = vmatprep.subr.mxu0 0.0
        %543 = vmatpush1.msra.mxu0 0.0
        %544 = vmatprep.subr.mxu0 0.0
        %545 = vmatpush1.msra.mxu0 0.0
        %546 = vmatprep.subr.mxu0 0.0
        %547 = vmatpush1.msra.mxu0 0.0
        %548 = vmatprep.subr.mxu0 0.0
        %549 = vmatpush1.msra.mxu0 0.0
        %550 = vmatprep.subr.mxu0 0.0
        %551 = vmatpush1.msra.mxu0 0.0
        %552 = vmatprep.subr.mxu0 0.0
        %553 = vmatpush1.msra.mxu0 0.0
        %554 = vmatprep.subr.mxu0 0.0
        %555 = vmatpush1.msra.mxu0 0.0
        %556 = vmatprep.subr.mxu0 0.0
        %557 = vmatpush1.msra.mxu0 0.0
        %558 = vmatprep.mubr.f32.mxu0 0.0
        %559 = vmatmul.mubr.f32.gmra.mrb[0].mxu0 %v492
        %v560 = vpop.f32.mrb[0].mxu0
        %v561 = vadd.f32 0.0, %v560
        %v562 = vpop.f32.mrb[0].mxu0
        %563 = vdwg.mxu0
        %v565 = vsel %vm406, %v326, 0
        %567 = vmatprep.subr.mxu0 0.0
        %568 = vmatpush1.msra.mxu0 %v561
        %569 = vmatprep.subr.mxu0 0.0
        %570 = vmatpush1.msra.mxu0 0.0
        %571 = vmatprep.subr.mxu0 0.0
        %572 = vmatpush1.msra.mxu0 0.0
        %573 = vmatprep.subr.mxu0 0.0
        %574 = vmatpush1.msra.mxu0 0.0
        %575 = vmatprep.subr.mxu0 0.0
        %576 = vmatpush1.msra.mxu0 0.0
        %577 = vmatprep.subr.mxu0 0.0
        %578 = vmatpush1.msra.mxu0 0.0
        %579 = vmatprep.subr.mxu0 0.0
        %580 = vmatpush1.msra.mxu0 0.0
        %581 = vmatprep.subr.mxu0 0.0
        %582 = vmatpush1.msra.mxu0 0.0
        %583 = vmatprep.subr.mxu0 0.0
        %584 = vmatpush1.msra.mxu0 0.0
        %585 = vmatprep.subr.mxu0 0.0
        %586 = vmatpush1.msra.mxu0 0.0
        %587 = vmatprep.subr.mxu0 0.0
        %588 = vmatpush1.msra.mxu0 0.0
        %589 = vmatprep.subr.mxu0 0.0
        %590 = vmatpush1.msra.mxu0 0.0
        %591 = vmatprep.subr.mxu0 0.0
        %592 = vmatpush1.msra.mxu0 0.0
        %593 = vmatprep.subr.mxu0 0.0
        %594 = vmatpush1.msra.mxu0 0.0
        %595 = vmatprep.subr.mxu0 0.0
        %596 = vmatpush1.msra.mxu0 0.0
        %597 = vmatprep.subr.mxu0 0.0
        %598 = vmatpush1.msra.mxu0 0.0
        %599 = vmatprep.subr.mxu0 0.0
        %600 = vmatpush1.msra.mxu0 0.0
        %601 = vmatprep.subr.mxu0 0.0
        %602 = vmatpush1.msra.mxu0 0.0
        %603 = vmatprep.subr.mxu0 0.0
        %604 = vmatpush1.msra.mxu0 0.0
        %605 = vmatprep.subr.mxu0 0.0
        %606 = vmatpush1.msra.mxu0 0.0
        %607 = vmatprep.subr.mxu0 0.0
        %608 = vmatpush1.msra.mxu0 0.0
        %609 = vmatprep.subr.mxu0 0.0
        %610 = vmatpush1.msra.mxu0 0.0
        %611 = vmatprep.subr.mxu0 0.0
        %612 = vmatpush1.msra.mxu0 0.0
        %613 = vmatprep.subr.mxu0 0.0
        %614 = vmatpush1.msra.mxu0 0.0
        %615 = vmatprep.subr.mxu0 0.0
        %616 = vmatpush1.msra.mxu0 0.0
        %617 = vmatprep.subr.mxu0 0.0
        %618 = vmatpush1.msra.mxu0 0.0
        %619 = vmatprep.subr.mxu0 0.0
        %620 = vmatpush1.msra.mxu0 0.0
        %621 = vmatprep.subr.mxu0 0.0
        %622 = vmatpush1.msra.mxu0 0.0
        %623 = vmatprep.subr.mxu0 0.0
        %624 = vmatpush1.msra.mxu0 0.0
        %625 = vmatprep.subr.mxu0 0.0
        %626 = vmatpush1.msra.mxu0 0.0
        %627 = vmatprep.subr.mxu0 0.0
        %628 = vmatpush1.msra.mxu0 0.0
        %629 = vmatprep.subr.mxu0 0.0
        %630 = vmatpush1.msra.mxu0 0.0
        %631 = vmatprep.mubr.f32.mxu0 0.0
        %632 = vmatmul.mubr.f32.gmra.mrb[0].mxu0 %v565
        %v633 = vpop.f32.mrb[0].mxu0
        %v634 = vadd.f32 0.0, %v633
        %v635 = vpop.f32.mrb[0].mxu0
        %636 = vdwg.mxu0
        %v637 = vld [vmem:[%s4 + $0x1] sm:$0x1]
        %v638 = vlaneseq
        %v639 = vshrl.u32 %v638, 7
        %v640 = vsub.s32 0, %v639
        %v641 = vrot.slane %v637, %v640
        %v642 = vmul.f32 %v634, %v641
        %v643 = vadd.f32 %v485, %v642
        %s644 = scalar_lea.vmem %s318, 16
        %v645 = vld [vmem:[%s644] sm:$0xff]
        %s646 = scalar_lea.vmem %s2, 32
        %v647 = vld [vmem:[%s646] sm:$0xff]
        %v648 = vld [vmem:[%s646 + $0x8] sm:$0xff]
        %v650 = vsel %vm332, %v645, 0
        %652 = vmatprep.subr.mxu0 0.0
        %653 = vmatpush1.msra.mxu0 %v647
        %654 = vmatprep.subr.mxu0 0.0
        %655 = vmatpush1.msra.mxu0 %v648
        %656 = vmatprep.subr.mxu0 0.0
        %657 = vmatpush1.msra.mxu0 0.0
        %658 = vmatprep.subr.mxu0 0.0
        %659 = vmatpush1.msra.mxu0 0.0
        %660 = vmatprep.subr.mxu0 0.0
        %661 = vmatpush1.msra.mxu0 0.0
        %662 = vmatprep.subr.mxu0 0.0
        %663 = vmatpush1.msra.mxu0 0.0
        %664 = vmatprep.subr.mxu0 0.0
        %665 = vmatpush1.msra.mxu0 0.0
        %666 = vmatprep.subr.mxu0 0.0
        %667 = vmatpush1.msra.mxu0 0.0
        %668 = vmatprep.subr.mxu0 0.0
        %669 = vmatpush1.msra.mxu0 0.0
        %670 = vmatprep.subr.mxu0 0.0
        %671 = vmatpush1.msra.mxu0 0.0
        %672 = vmatprep.subr.mxu0 0.0
        %673 = vmatpush1.msra.mxu0 0.0
        %674 = vmatprep.subr.mxu0 0.0
        %675 = vmatpush1.msra.mxu0 0.0
        %676 = vmatprep.subr.mxu0 0.0
        %677 = vmatpush1.msra.mxu0 0.0
        %678 = vmatprep.subr.mxu0 0.0
        %679 = vmatpush1.msra.mxu0 0.0
        %680 = vmatprep.subr.mxu0 0.0
        %681 = vmatpush1.msra.mxu0 0.0
        %682 = vmatprep.subr.mxu0 0.0
        %683 = vmatpush1.msra.mxu0 0.0
        %684 = vmatprep.subr.mxu0 0.0
        %685 = vmatpush1.msra.mxu0 0.0
        %686 = vmatprep.subr.mxu0 0.0
        %687 = vmatpush1.msra.mxu0 0.0
        %688 = vmatprep.subr.mxu0 0.0
        %689 = vmatpush1.msra.mxu0 0.0
        %690 = vmatprep.subr.mxu0 0.0
        %691 = vmatpush1.msra.mxu0 0.0
        %692 = vmatprep.subr.mxu0 0.0
        %693 = vmatpush1.msra.mxu0 0.0
        %694 = vmatprep.subr.mxu0 0.0
        %695 = vmatpush1.msra.mxu0 0.0
        %696 = vmatprep.subr.mxu0 0.0
        %697 = vmatpush1.msra.mxu0 0.0
        %698 = vmatprep.subr.mxu0 0.0
        %699 = vmatpush1.msra.mxu0 0.0
        %700 = vmatprep.subr.mxu0 0.0
        %701 = vmatpush1.msra.mxu0 0.0
        %702 = vmatprep.subr.mxu0 0.0
        %703 = vmatpush1.msra.mxu0 0.0
        %704 = vmatprep.subr.mxu0 0.0
        %705 = vmatpush1.msra.mxu0 0.0
        %706 = vmatprep.subr.mxu0 0.0
        %707 = vmatpush1.msra.mxu0 0.0
        %708 = vmatprep.subr.mxu0 0.0
        %709 = vmatpush1.msra.mxu0 0.0
        %710 = vmatprep.subr.mxu0 0.0
        %711 = vmatpush1.msra.mxu0 0.0
        %712 = vmatprep.subr.mxu0 0.0
        %713 = vmatpush1.msra.mxu0 0.0
        %714 = vmatprep.subr.mxu0 0.0
        %715 = vmatpush1.msra.mxu0 0.0
        %716 = vmatprep.mubr.f32.mxu0 0.0
        %717 = vmatmul.mubr.f32.gmra.mrb[0].mxu0 %v650
        %v718 = vpop.f32.mrb[0].mxu0
        %v719 = vadd.f32 0.0, %v718
        %v720 = vpop.f32.mrb[0].mxu0
        %721 = vdwg.mxu0
        %v723 = vsel %vm406, %v328, 0
        %725 = vmatprep.subr.mxu0 0.0
        %726 = vmatpush1.msra.mxu0 %v719
        %727 = vmatprep.subr.mxu0 0.0
        %728 = vmatpush1.msra.mxu0 0.0
        %729 = vmatprep.subr.mxu0 0.0
        %730 = vmatpush1.msra.mxu0 0.0
        %731 = vmatprep.subr.mxu0 0.0
        %732 = vmatpush1.msra.mxu0 0.0
        %733 = vmatprep.subr.mxu0 0.0
        %734 = vmatpush1.msra.mxu0 0.0
        %735 = vmatprep.subr.mxu0 0.0
        %736 = vmatpush1.msra.mxu0 0.0
        %737 = vmatprep.subr.mxu0 0.0
        %738 = vmatpush1.msra.mxu0 0.0
        %739 = vmatprep.subr.mxu0 0.0
        %740 = vmatpush1.msra.mxu0 0.0
        %741 = vmatprep.subr.mxu0 0.0
        %742 = vmatpush1.msra.mxu0 0.0
        %743 = vmatprep.subr.mxu0 0.0
        %744 = vmatpush1.msra.mxu0 0.0
        %745 = vmatprep.subr.mxu0 0.0
        %746 = vmatpush1.msra.mxu0 0.0
        %747 = vmatprep.subr.mxu0 0.0
        %748 = vmatpush1.msra.mxu0 0.0
        %749 = vmatprep.subr.mxu0 0.0
        %750 = vmatpush1.msra.mxu0 0.0
        %751 = vmatprep.subr.mxu0 0.0
        %752 = vmatpush1.msra.mxu0 0.0
        %753 = vmatprep.subr.mxu0 0.0
        %754 = vmatpush1.msra.mxu0 0.0
        %755 = vmatprep.subr.mxu0 0.0
        %756 = vmatpush1.msra.mxu0 0.0
        %757 = vmatprep.subr.mxu0 0.0
        %758 = vmatpush1.msra.mxu0 0.0
        %759 = vmatprep.subr.mxu0 0.0
        %760 = vmatpush1.msra.mxu0 0.0
        %761 = vmatprep.subr.mxu0 0.0
        %762 = vmatpush1.msra.mxu0 0.0
        %763 = vmatprep.subr.mxu0 0.0
        %764 = vmatpush1.msra.mxu0 0.0
        %765 = vmatprep.subr.mxu0 0.0
        %766 = vmatpush1.msra.mxu0 0.0
        %767 = vmatprep.subr.mxu0 0.0
        %768 = vmatpush1.msra.mxu0 0.0
        %769 = vmatprep.subr.mxu0 0.0
        %770 = vmatpush1.msra.mxu0 0.0
        %771 = vmatprep.subr.mxu0 0.0
        %772 = vmatpush1.msra.mxu0 0.0
        %773 = vmatprep.subr.mxu0 0.0
        %774 = vmatpush1.msra.mxu0 0.0
        %775 = vmatprep.subr.mxu0 0.0
        %776 = vmatpush1.msra.mxu0 0.0
        %777 = vmatprep.subr.mxu0 0.0
        %778 = vmatpush1.msra.mxu0 0.0
        %779 = vmatprep.subr.mxu0 0.0
        %780 = vmatpush1.msra.mxu0 0.0
        %781 = vmatprep.subr.mxu0 0.0
        %782 = vmatpush1.msra.mxu0 0.0
        %783 = vmatprep.subr.mxu0 0.0
        %784 = vmatpush1.msra.mxu0 0.0
        %785 = vmatprep.subr.mxu0 0.0
        %786 = vmatpush1.msra.mxu0 0.0
        %787 = vmatprep.subr.mxu0 0.0
        %788 = vmatpush1.msra.mxu0 0.0
        %789 = vmatprep.mubr.f32.mxu0 0.0
        %790 = vmatmul.mubr.f32.gmra.mrb[0].mxu0 %v723
        %v791 = vpop.f32.mrb[0].mxu0
        %v792 = vadd.f32 0.0, %v791
        %v793 = vpop.f32.mrb[0].mxu0
        %794 = vdwg.mxu0
        %v795 = vld [vmem:[%s4 + $0x2] sm:$0x1]
        %v796 = vlaneseq
        %v797 = vshrl.u32 %v796, 7
        %v798 = vsub.s32 0, %v797
        %v799 = vrot.slane %v795, %v798
        %v800 = vmul.f32 %v792, %v799
        %v801 = vadd.f32 %v643, %v800
        %v802 = vadd.f32 %v403, %v801
        %v803 = vld [vmem:[%s6] sm:$0x1]
        %v804 = vlaneseq
        %v805 = vshrl.u32 %v804, 7
        %v806 = vsub.s32 0, %v805
        %v807 = vrot.slane %v803, %v806
        %v808 = vadd.f32 %v802, %v807
        %v809 = vmax.f32 %v808, 0.0
        %v810 = vadd.f32 %v561, %v801
        %v811 = vld [vmem:[%s6 + $0x1] sm:$0x1]
        %v812 = vlaneseq
        %v813 = vshrl.u32 %v812, 7
        %v814 = vsub.s32 0, %v813
        %v815 = vrot.slane %v811, %v814
        %817 = vrot.lane.b32.xlu0 %v815, 32
        %v818 = vpop.permute.xlu0 %817
        %v820 = vadd.f32 %v810, %v818
        %v821 = vmax.f32 %v820, 0.0
        %v822 = vadd.f32 %v719, %v801
        %v823 = vld [vmem:[%s6 + $0x2] sm:$0x1]
        %v824 = vlaneseq
        %v825 = vshrl.u32 %v824, 7
        %v826 = vsub.s32 0, %v825
        %v827 = vrot.slane %v823, %v826
        %829 = vrot.lane.b32.xlu0 %v827, 64
        %v830 = vpop.permute.xlu0 %829
        %v832 = vadd.f32 %v822, %v830
        %v833 = vmax.f32 %v832, 0.0
        %v834 = vld [vmem:[%s3] sm:$0xff]
        %v835 = vld [vmem:[%s3 + $0x8] sm:$0xff]
        %v836 = vld [vmem:[%s3 + $0x10] sm:$0xff]
        %v837 = vld [vmem:[%s3 + $0x18] sm:$0xff]
        %vm838 = vcmask 261120
        %v840 = vsel %vm838, %v809, 0
        %842 = vmatprep.subr.mxu0 0.0
        %843 = vmatpush1.msra.mxu0 %v834
        %844 = vmatprep.subr.mxu0 0.0
        %845 = vmatpush1.msra.mxu0 %v835
        %846 = vmatprep.subr.mxu0 0.0
        %847 = vmatpush1.msra.mxu0 %v836
        %848 = vmatprep.subr.mxu0 0.0
        %849 = vmatpush1.msra.mxu0 %v837
        %850 = vmatprep.subr.mxu0 0.0
        %851 = vmatpush1.msra.mxu0 0.0
        %852 = vmatprep.subr.mxu0 0.0
        %853 = vmatpush1.msra.mxu0 0.0
        %854 = vmatprep.subr.mxu0 0.0
        %855 = vmatpush1.msra.mxu0 0.0
        %856 = vmatprep.subr.mxu0 0.0
        %857 = vmatpush1.msra.mxu0 0.0
        %858 = vmatprep.subr.mxu0 0.0
        %859 = vmatpush1.msra.mxu0 0.0
        %860 = vmatprep.subr.mxu0 0.0
        %861 = vmatpush1.msra.mxu0 0.0
        %862 = vmatprep.subr.mxu0 0.0
        %863 = vmatpush1.msra.mxu0 0.0
        %864 = vmatprep.subr.mxu0 0.0
        %865 = vmatpush1.msra.mxu0 0.0
        %866 = vmatprep.subr.mxu0 0.0
        %867 = vmatpush1.msra.mxu0 0.0
        %868 = vmatprep.subr.mxu0 0.0
        %869 = vmatpush1.msra.mxu0 0.0
        %870 = vmatprep.subr.mxu0 0.0
        %871 = vmatpush1.msra.mxu0 0.0
        %872 = vmatprep.subr.mxu0 0.0
        %873 = vmatpush1.msra.mxu0 0.0
        %874 = vmatprep.subr.mxu0 0.0
        %875 = vmatpush1.msra.mxu0 0.0
        %876 = vmatprep.subr.mxu0 0.0
        %877 = vmatpush1.msra.mxu0 0.0
        %878 = vmatprep.subr.mxu0 0.0
        %879 = vmatpush1.msra.mxu0 0.0
        %880 = vmatprep.subr.mxu0 0.0
        %881 = vmatpush1.msra.mxu0 0.0
        %882 = vmatprep.subr.mxu0 0.0
        %883 = vmatpush1.msra.mxu0 0.0
        %884 = vmatprep.subr.mxu0 0.0
        %885 = vmatpush1.msra.mxu0 0.0
        %886 = vmatprep.subr.mxu0 0.0
        %887 = vmatpush1.msra.mxu0 0.0
        %888 = vmatprep.subr.mxu0 0.0
        %889 = vmatpush1.msra.mxu0 0.0
        %890 = vmatprep.subr.mxu0 0.0
        %891 = vmatpush1.msra.mxu0 0.0
        %892 = vmatprep.subr.mxu0 0.0
        %893 = vmatpush1.msra.mxu0 0.0
        %894 = vmatprep.subr.mxu0 0.0
        %895 = vmatpush1.msra.mxu0 0.0
        %896 = vmatprep.subr.mxu0 0.0
        %897 = vmatpush1.msra.mxu0 0.0
        %898 = vmatprep.subr.mxu0 0.0
        %899 = vmatpush1.msra.mxu0 0.0
        %900 = vmatprep.subr.mxu0 0.0
        %901 = vmatpush1.msra.mxu0 0.0
        %902 = vmatprep.subr.mxu0 0.0
        %903 = vmatpush1.msra.mxu0 0.0
        %904 = vmatprep.subr.mxu0 0.0
        %905 = vmatpush1.msra.mxu0 0.0
        %906 = vmatprep.mubr.f32.mxu0 0.0
        %907 = vmatmul.mubr.f32.gmra.mrb[0].mxu0 %v840
        %v908 = vpop.f32.mrb[0].mxu0
        %v909 = vadd.f32 0.0, %v908
        %v910 = vpop.f32.mrb[0].mxu0
        %911 = vdwg.mxu0
        %912 = vmatprep.subr.mxu0 0.0
        %913 = vmatpush1.msra.mxu0 %v909
        %914 = vmatprep.subr.mxu0 0.0
        %915 = vmatpush1.msra.mxu0 0.0
        %916 = vmatprep.subr.mxu0 0.0
        %917 = vmatpush1.msra.mxu0 0.0
        %918 = vmatprep.subr.mxu0 0.0
        %919 = vmatpush1.msra.mxu0 0.0
        %920 = vmatprep.subr.mxu0 0.0
        %921 = vmatpush1.msra.mxu0 0.0
        %922 = vmatprep.subr.mxu0 0.0
        %923 = vmatpush1.msra.mxu0 0.0
        %924 = vmatprep.subr.mxu0 0.0
        %925 = vmatpush1.msra.mxu0 0.0
        %926 = vmatprep.subr.mxu0 0.0
        %927 = vmatpush1.msra.mxu0 0.0
        %928 = vmatprep.subr.mxu0 0.0
        %929 = vmatpush1.msra.mxu0 0.0
        %930 = vmatprep.subr.mxu0 0.0
        %931 = vmatpush1.msra.mxu0 0.0
        %932 = vmatprep.subr.mxu0 0.0
        %933 = vmatpush1.msra.mxu0 0.0
        %934 = vmatprep.subr.mxu0 0.0
        %935 = vmatpush1.msra.mxu0 0.0
        %936 = vmatprep.subr.mxu0 0.0
        %937 = vmatpush1.msra.mxu0 0.0
        %938 = vmatprep.subr.mxu0 0.0
        %939 = vmatpush1.msra.mxu0 0.0
        %940 = vmatprep.subr.mxu0 0.0
        %941 = vmatpush1.msra.mxu0 0.0
        %942 = vmatprep.subr.mxu0 0.0
        %943 = vmatpush1.msra.mxu0 0.0
        %944 = vmatprep.subr.mxu0 0.0
        %945 = vmatpush1.msra.mxu0 0.0
        %946 = vmatprep.subr.mxu0 0.0
        %947 = vmatpush1.msra.mxu0 0.0
        %948 = vmatprep.subr.mxu0 0.0
        %949 = vmatpush1.msra.mxu0 0.0
        %950 = vmatprep.subr.mxu0 0.0
        %951 = vmatpush1.msra.mxu0 0.0
        %952 = vmatprep.subr.mxu0 0.0
        %953 = vmatpush1.msra.mxu0 0.0
        %954 = vmatprep.subr.mxu0 0.0
        %955 = vmatpush1.msra.mxu0 0.0
        %956 = vmatprep.subr.mxu0 0.0
        %957 = vmatpush1.msra.mxu0 0.0
        %958 = vmatprep.subr.mxu0 0.0
        %959 = vmatpush1.msra.mxu0 0.0
        %960 = vmatprep.subr.mxu0 0.0
        %961 = vmatpush1.msra.mxu0 0.0
        %962 = vmatprep.subr.mxu0 0.0
        %963 = vmatpush1.msra.mxu0 0.0
        %964 = vmatprep.subr.mxu0 0.0
        %965 = vmatpush1.msra.mxu0 0.0
        %966 = vmatprep.subr.mxu0 0.0
        %967 = vmatpush1.msra.mxu0 0.0
        %968 = vmatprep.subr.mxu0 0.0
        %969 = vmatpush1.msra.mxu0 0.0
        %970 = vmatprep.subr.mxu0 0.0
        %971 = vmatpush1.msra.mxu0 0.0
        %972 = vmatprep.subr.mxu0 0.0
        %973 = vmatpush1.msra.mxu0 0.0
        %974 = vmatprep.subr.mxu0 0.0
        %975 = vmatpush1.msra.mxu0 0.0
        %976 = vmatprep.mubr.f32.mxu0 0.0
        %977 = vmatmul.mubr.f32.gmra.mrb[0].mxu0 %v408
        %v978 = vpop.f32.mrb[0].mxu0
        %v979 = vadd.f32 0.0, %v978
        %v980 = vpop.f32.mrb[0].mxu0
        %981 = vdwg.mxu0
        %v982 = vld [vmem:[%s5] sm:$0x1]
        %v983 = vlaneseq
        %v984 = vshrl.u32 %v983, 7
        %v985 = vsub.s32 0, %v984
        %v986 = vrot.slane %v982, %v985
        %v987 = vmul.f32 %v979, %v986
        %s988 = scalar_lea.vmem %s3, 32
        %v989 = vld [vmem:[%s988] sm:$0xff]
        %v990 = vld [vmem:[%s988 + $0x8] sm:$0xff]
        %v991 = vld [vmem:[%s988 + $0x10] sm:$0xff]
        %v992 = vld [vmem:[%s988 + $0x18] sm:$0xff]
        %994 = vrot.lane.b32.xlu0 %v821, 96
        %v995 = vpop.permute.xlu0 %994
        %v996 = vsel %vm838, %v995, 0
        %998 = vmatprep.subr.mxu0 0.0
        %999 = vmatpush1.msra.mxu0 %v989
        %1000 = vmatprep.subr.mxu0 0.0
        %1001 = vmatpush1.msra.mxu0 %v990
        %1002 = vmatprep.subr.mxu0 0.0
        %1003 = vmatpush1.msra.mxu0 %v991
        %1004 = vmatprep.subr.mxu0 0.0
        %1005 = vmatpush1.msra.mxu0 %v992
        %1006 = vmatprep.subr.mxu0 0.0
        %1007 = vmatpush1.msra.mxu0 0.0
        %1008 = vmatprep.subr.mxu0 0.0
        %1009 = vmatpush1.msra.mxu0 0.0
        %1010 = vmatprep.subr.mxu0 0.0
        %1011 = vmatpush1.msra.mxu0 0.0
        %1012 = vmatprep.subr.mxu0 0.0
        %1013 = vmatpush1.msra.mxu0 0.0
        %1014 = vmatprep.subr.mxu0 0.0
        %1015 = vmatpush1.msra.mxu0 0.0
        %1016 = vmatprep.subr.mxu0 0.0
        %1017 = vmatpush1.msra.mxu0 0.0
        %1018 = vmatprep.subr.mxu0 0.0
        %1019 = vmatpush1.msra.mxu0 0.0
        %1020 = vmatprep.subr.mxu0 0.0
        %1021 = vmatpush1.msra.mxu0 0.0
        %1022 = vmatprep.subr.mxu0 0.0
        %1023 = vmatpush1.msra.mxu0 0.0
        %1024 = vmatprep.subr.mxu0 0.0
        %1025 = vmatpush1.msra.mxu0 0.0
        %1026 = vmatprep.subr.mxu0 0.0
        %1027 = vmatpush1.msra.mxu0 0.0
        %1028 = vmatprep.subr.mxu0 0.0
        %1029 = vmatpush1.msra.mxu0 0.0
        %1030 = vmatprep.subr.mxu0 0.0
        %1031 = vmatpush1.msra.mxu0 0.0
        %1032 = vmatprep.subr.mxu0 0.0
        %1033 = vmatpush1.msra.mxu0 0.0
        %1034 = vmatprep.subr.mxu0 0.0
        %1035 = vmatpush1.msra.mxu0 0.0
        %1036 = vmatprep.subr.mxu0 0.0
        %1037 = vmatpush1.msra.mxu0 0.0
        %1038 = vmatprep.subr.mxu0 0.0
        %1039 = vmatpush1.msra.mxu0 0.0
        %1040 = vmatprep.subr.mxu0 0.0
        %1041 = vmatpush1.msra.mxu0 0.0
        %1042 = vmatprep.subr.mxu0 0.0
        %1043 = vmatpush1.msra.mxu0 0.0
        %1044 = vmatprep.subr.mxu0 0.0
        %1045 = vmatpush1.msra.mxu0 0.0
        %1046 = vmatprep.subr.mxu0 0.0
        %1047 = vmatpush1.msra.mxu0 0.0
        %1048 = vmatprep.subr.mxu0 0.0
        %1049 = vmatpush1.msra.mxu0 0.0
        %1050 = vmatprep.subr.mxu0 0.0
        %1051 = vmatpush1.msra.mxu0 0.0
        %1052 = vmatprep.subr.mxu0 0.0
        %1053 = vmatpush1.msra.mxu0 0.0
        %1054 = vmatprep.subr.mxu0 0.0
        %1055 = vmatpush1.msra.mxu0 0.0
        %1056 = vmatprep.subr.mxu0 0.0
        %1057 = vmatpush1.msra.mxu0 0.0
        %1058 = vmatprep.subr.mxu0 0.0
        %1059 = vmatpush1.msra.mxu0 0.0
        %1060 = vmatprep.subr.mxu0 0.0
        %1061 = vmatpush1.msra.mxu0 0.0
        %1062 = vmatprep.mubr.f32.mxu0 0.0
        %1063 = vmatmul.mubr.f32.gmra.mrb[0].mxu0 %v996
        %v1064 = vpop.f32.mrb[0].mxu0
        %v1065 = vadd.f32 0.0, %v1064
        %v1066 = vpop.f32.mrb[0].mxu0
        %1067 = vdwg.mxu0
        %1068 = vmatprep.subr.mxu0 0.0
        %1069 = vmatpush1.msra.mxu0 %v1065
        %1070 = vmatprep.subr.mxu0 0.0
        %1071 = vmatpush1.msra.mxu0 0.0
        %1072 = vmatprep.subr.mxu0 0.0
        %1073 = vmatpush1.msra.mxu0 0.0
        %1074 = vmatprep.subr.mxu0 0.0
        %1075 = vmatpush1.msra.mxu0 0.0
        %1076 = vmatprep.subr.mxu0 0.0
        %1077 = vmatpush1.msra.mxu0 0.0
        %1078 = vmatprep.subr.mxu0 0.0
        %1079 = vmatpush1.msra.mxu0 0.0
        %1080 = vmatprep.subr.mxu0 0.0
        %1081 = vmatpush1.msra.mxu0 0.0
        %1082 = vmatprep.subr.mxu0 0.0
        %1083 = vmatpush1.msra.mxu0 0.0
        %1084 = vmatprep.subr.mxu0 0.0
        %1085 = vmatpush1.msra.mxu0 0.0
        %1086 = vmatprep.subr.mxu0 0.0
        %1087 = vmatpush1.msra.mxu0 0.0
        %1088 = vmatprep.subr.mxu0 0.0
        %1089 = vmatpush1.msra.mxu0 0.0
        %1090 = vmatprep.subr.mxu0 0.0
        %1091 = vmatpush1.msra.mxu0 0.0
        %1092 = vmatprep.subr.mxu0 0.0
        %1093 = vmatpush1.msra.mxu0 0.0
        %1094 = vmatprep.subr.mxu0 0.0
        %1095 = vmatpush1.msra.mxu0 0.0
        %1096 = vmatprep.subr.mxu0 0.0
        %1097 = vmatpush1.msra.mxu0 0.0
        %1098 = vmatprep.subr.mxu0 0.0
        %1099 = vmatpush1.msra.mxu0 0.0
        %1100 = vmatprep.subr.mxu0 0.0
        %1101 = vmatpush1.msra.mxu0 0.0
        %1102 = vmatprep.subr.mxu0 0.0
        %1103 = vmatpush1.msra.mxu0 0.0
        %1104 = vmatprep.subr.mxu0 0.0
        %1105 = vmatpush1.msra.mxu0 0.0
        %1106 = vmatprep.subr.mxu0 0.0
        %1107 = vmatpush1.msra.mxu0 0.0
        %1108 = vmatprep.subr.mxu0 0.0
        %1109 = vmatpush1.msra.mxu0 0.0
        %1110 = vmatprep.subr.mxu0 0.0
        %1111 = vmatpush1.msra.mxu0 0.0
        %1112 = vmatprep.subr.mxu0 0.0
        %1113 = vmatpush1.msra.mxu0 0.0
        %1114 = vmatprep.subr.mxu0 0.0
        %1115 = vmatpush1.msra.mxu0 0.0
        %1116 = vmatprep.subr.mxu0 0.0
        %1117 = vmatpush1.msra.mxu0 0.0
        %1118 = vmatprep.subr.mxu0 0.0
        %1119 = vmatpush1.msra.mxu0 0.0
        %1120 = vmatprep.subr.mxu0 0.0
        %1121 = vmatpush1.msra.mxu0 0.0
        %1122 = vmatprep.subr.mxu0 0.0
        %1123 = vmatpush1.msra.mxu0 0.0
        %1124 = vmatprep.subr.mxu0 0.0
        %1125 = vmatpush1.msra.mxu0 0.0
        %1126 = vmatprep.subr.mxu0 0.0
        %1127 = vmatpush1.msra.mxu0 0.0
        %1128 = vmatprep.subr.mxu0 0.0
        %1129 = vmatpush1.msra.mxu0 0.0
        %1130 = vmatprep.subr.mxu0 0.0
        %1131 = vmatpush1.msra.mxu0 0.0
        %1132 = vmatprep.mubr.f32.mxu0 0.0
        %1133 = vmatmul.mubr.f32.gmra.mrb[0].mxu0 %v565
        %v1134 = vpop.f32.mrb[0].mxu0
        %v1135 = vadd.f32 0.0, %v1134
        %v1136 = vpop.f32.mrb[0].mxu0
        %1137 = vdwg.mxu0
        %v1138 = vld [vmem:[%s5 + $0x1] sm:$0x1]
        %v1139 = vlaneseq
        %v1140 = vshrl.u32 %v1139, 7
        %v1141 = vsub.s32 0, %v1140
        %v1142 = vrot.slane %v1138, %v1141
        %v1143 = vmul.f32 %v1135, %v1142
        %v1144 = vadd.f32 %v987, %v1143
        %s1145 = scalar_lea.vmem %s3, 64
        %v1146 = vld [vmem:[%s1145] sm:$0xff]
        %v1147 = vld [vmem:[%s1145 + $0x8] sm:$0xff]
        %v1148 = vld [vmem:[%s1145 + $0x10] sm:$0xff]
        %v1149 = vld [vmem:[%s1145 + $0x18] sm:$0xff]
        %1151 = vrot.lane.b32.xlu0 %v833, 64
        %v1152 = vpop.permute.xlu0 %1151
        %v1153 = vsel %vm838, %v1152, 0
        %1155 = vmatprep.subr.mxu0 0.0
        %1156 = vmatpush1.msra.mxu0 %v1146
        %1157 = vmatprep.subr.mxu0 0.0
        %1158 = vmatpush1.msra.mxu0 %v1147
        %1159 = vmatprep.subr.mxu0 0.0
        %1160 = vmatpush1.msra.mxu0 %v1148
        %1161 = vmatprep.subr.mxu0 0.0
        %1162 = vmatpush1.msra.mxu0 %v1149
        %1163 = vmatprep.subr.mxu0 0.0
        %1164 = vmatpush1.msra.mxu0 0.0
        %1165 = vmatprep.subr.mxu0 0.0
        %1166 = vmatpush1.msra.mxu0 0.0
        %1167 = vmatprep.subr.mxu0 0.0
        %1168 = vmatpush1.msra.mxu0 0.0
        %1169 = vmatprep.subr.mxu0 0.0
        %1170 = vmatpush1.msra.mxu0 0.0
        %1171 = vmatprep.subr.mxu0 0.0
        %1172 = vmatpush1.msra.mxu0 0.0
        %1173 = vmatprep.subr.mxu0 0.0
        %1174 = vmatpush1.msra.mxu0 0.0
        %1175 = vmatprep.subr.mxu0 0.0
        %1176 = vmatpush1.msra.mxu0 0.0
        %1177 = vmatprep.subr.mxu0 0.0
        %1178 = vmatpush1.msra.mxu0 0.0
        %1179 = vmatprep.subr.mxu0 0.0
        %1180 = vmatpush1.msra.mxu0 0.0
        %1181 = vmatprep.subr.mxu0 0.0
        %1182 = vmatpush1.msra.mxu0 0.0
        %1183 = vmatprep.subr.mxu0 0.0
        %1184 = vmatpush1.msra.mxu0 0.0
        %1185 = vmatprep.subr.mxu0 0.0
        %1186 = vmatpush1.msra.mxu0 0.0
        %1187 = vmatprep.subr.mxu0 0.0
        %1188 = vmatpush1.msra.mxu0 0.0
        %1189 = vmatprep.subr.mxu0 0.0
        %1190 = vmatpush1.msra.mxu0 0.0
        %1191 = vmatprep.subr.mxu0 0.0
        %1192 = vmatpush1.msra.mxu0 0.0
        %1193 = vmatprep.subr.mxu0 0.0
        %1194 = vmatpush1.msra.mxu0 0.0
        %1195 = vmatprep.subr.mxu0 0.0
        %1196 = vmatpush1.msra.mxu0 0.0
        %1197 = vmatprep.subr.mxu0 0.0
        %1198 = vmatpush1.msra.mxu0 0.0
        %1199 = vmatprep.subr.mxu0 0.0
        %1200 = vmatpush1.msra.mxu0 0.0
        %1201 = vmatprep.subr.mxu0 0.0
        %1202 = vmatpush1.msra.mxu0 0.0
        %1203 = vmatprep.subr.mxu0 0.0
        %1204 = vmatpush1.msra.mxu0 0.0
        %1205 = vmatprep.subr.mxu0 0.0
        %1206 = vmatpush1.msra.mxu0 0.0
        %1207 = vmatprep.subr.mxu0 0.0
        %1208 = vmatpush1.msra.mxu0 0.0
        %1209 = vmatprep.subr.mxu0 0.0
        %1210 = vmatpush1.msra.mxu0 0.0
        %1211 = vmatprep.subr.mxu0 0.0
        %1212 = vmatpush1.msra.mxu0 0.0
        %1213 = vmatprep.subr.mxu0 0.0
        %1214 = vmatpush1.msra.mxu0 0.0
        %1215 = vmatprep.subr.mxu0 0.0
        %1216 = vmatpush1.msra.mxu0 0.0
        %1217 = vmatprep.subr.mxu0 0.0
        %1218 = vmatpush1.msra.mxu0 0.0
        %1219 = vmatprep.mubr.f32.mxu0 0.0
        %1220 = vmatmul.mubr.f32.gmra.mrb[0].mxu0 %v1153
        %v1221 = vpop.f32.mrb[0].mxu0
        %v1222 = vadd.f32 0.0, %v1221
        %v1223 = vpop.f32.mrb[0].mxu0
        %1224 = vdwg.mxu0
        %1225 = vmatprep.subr.mxu0 0.0
        %1226 = vmatpush1.msra.mxu0 %v1222
        %1227 = vmatprep.subr.mxu0 0.0
        %1228 = vmatpush1.msra.mxu0 0.0
        %1229 = vmatprep.subr.mxu0 0.0
        %1230 = vmatpush1.msra.mxu0 0.0
        %1231 = vmatprep.subr.mxu0 0.0
        %1232 = vmatpush1.msra.mxu0 0.0
        %1233 = vmatprep.subr.mxu0 0.0
        %1234 = vmatpush1.msra.mxu0 0.0
        %1235 = vmatprep.subr.mxu0 0.0
        %1236 = vmatpush1.msra.mxu0 0.0
        %1237 = vmatprep.subr.mxu0 0.0
        %1238 = vmatpush1.msra.mxu0 0.0
        %1239 = vmatprep.subr.mxu0 0.0
        %1240 = vmatpush1.msra.mxu0 0.0
        %1241 = vmatprep.subr.mxu0 0.0
        %1242 = vmatpush1.msra.mxu0 0.0
        %1243 = vmatprep.subr.mxu0 0.0
        %1244 = vmatpush1.msra.mxu0 0.0
        %1245 = vmatprep.subr.mxu0 0.0
        %1246 = vmatpush1.msra.mxu0 0.0
        %1247 = vmatprep.subr.mxu0 0.0
        %1248 = vmatpush1.msra.mxu0 0.0
        %1249 = vmatprep.subr.mxu0 0.0
        %1250 = vmatpush1.msra.mxu0 0.0
        %1251 = vmatprep.subr.mxu0 0.0
        %1252 = vmatpush1.msra.mxu0 0.0
        %1253 = vmatprep.subr.mxu0 0.0
        %1254 = vmatpush1.msra.mxu0 0.0
        %1255 = vmatprep.subr.mxu0 0.0
        %1256 = vmatpush1.msra.mxu0 0.0
        %1257 = vmatprep.subr.mxu0 0.0
        %1258 = vmatpush1.msra.mxu0 0.0
        %1259 = vmatprep.subr.mxu0 0.0
        %1260 = vmatpush1.msra.mxu0 0.0
        %1261 = vmatprep.subr.mxu0 0.0
        %1262 = vmatpush1.msra.mxu0 0.0
        %1263 = vmatprep.subr.mxu0 0.0
        %1264 = vmatpush1.msra.mxu0 0.0
        %1265 = vmatprep.subr.mxu0 0.0
        %1266 = vmatpush1.msra.mxu0 0.0
        %1267 = vmatprep.subr.mxu0 0.0
        %1268 = vmatpush1.msra.mxu0 0.0
        %1269 = vmatprep.subr.mxu0 0.0
        %1270 = vmatpush1.msra.mxu0 0.0
        %1271 = vmatprep.subr.mxu0 0.0
        %1272 = vmatpush1.msra.mxu0 0.0
        %1273 = vmatprep.subr.mxu0 0.0
        %1274 = vmatpush1.msra.mxu0 0.0
        %1275 = vmatprep.subr.mxu0 0.0
        %1276 = vmatpush1.msra.mxu0 0.0
        %1277 = vmatprep.subr.mxu0 0.0
        %1278 = vmatpush1.msra.mxu0 0.0
        %1279 = vmatprep.subr.mxu0 0.0
        %1280 = vmatpush1.msra.mxu0 0.0
        %1281 = vmatprep.subr.mxu0 0.0
        %1282 = vmatpush1.msra.mxu0 0.0
        %1283 = vmatprep.subr.mxu0 0.0
        %1284 = vmatpush1.msra.mxu0 0.0
        %1285 = vmatprep.subr.mxu0 0.0
        %1286 = vmatpush1.msra.mxu0 0.0
        %1287 = vmatprep.subr.mxu0 0.0
        %1288 = vmatpush1.msra.mxu0 0.0
        %1289 = vmatprep.mubr.f32.mxu0 0.0
        %1290 = vmatmul.mubr.f32.gmra.mrb[0].mxu0 %v723
        %v1291 = vpop.f32.mrb[0].mxu0
        %v1292 = vadd.f32 0.0, %v1291
        %v1293 = vpop.f32.mrb[0].mxu0
        %1294 = vdwg.mxu0
        %v1295 = vld [vmem:[%s5 + $0x2] sm:$0x1]
        %v1296 = vlaneseq
        %v1297 = vshrl.u32 %v1296, 7
        %v1298 = vsub.s32 0, %v1297
        %v1299 = vrot.slane %v1295, %v1298
        %v1300 = vmul.f32 %v1292, %v1299
        %v1301 = vadd.f32 %v1144, %v1300
        %v1302 = vadd.f32 %v909, %v1301
        %v1303 = vld [vmem:[%s7] sm:$0x1]
        %v1304 = vlaneseq
        %v1305 = vshrl.u32 %v1304, 7
        %v1306 = vsub.s32 0, %v1305
        %v1307 = vrot.slane %v1303, %v1306
        %v1308 = vadd.f32 %v1302, %v1307
        %v1309 = vmax.f32 %v1308, 0.0
        %v1310 = vadd.f32 %v1065, %v1301
        %v1311 = vld [vmem:[%s7 + $0x1] sm:$0x1]
        %v1312 = vlaneseq
        %v1313 = vshrl.u32 %v1312, 7
        %v1314 = vsub.s32 0, %v1313
        %v1315 = vrot.slane %v1311, %v1314
        %1317 = vrot.lane.b32.xlu0 %v1315, 8
        %v1318 = vpop.permute.xlu0 %1317
        %v1320 = vadd.f32 %v1310, %v1318
        %v1321 = vmax.f32 %v1320, 0.0
        %1323 = vrot.lane.b32.xlu0 %v1321, 120
        %v1324 = vpop.permute.xlu0 %1323
        %v1326 = vadd.f32 %v1309, %v1324
        %v1327 = vadd.f32 %v1222, %v1301
        %v1328 = vld [vmem:[%s7 + $0x2] sm:$0x1]
        %v1329 = vlaneseq
        %v1330 = vshrl.u32 %v1329, 7
        %v1331 = vsub.s32 0, %v1330
        %v1332 = vrot.slane %v1328, %v1331
        %1334 = vrot.lane.b32.xlu0 %v1332, 16
        %v1335 = vpop.permute.xlu0 %1334
        %v1337 = vadd.f32 %v1327, %v1335
        %v1338 = vmax.f32 %v1337, 0.0
        %1340 = vrot.lane.b32.xlu0 %v1338, 112
        %v1341 = vpop.permute.xlu0 %1340
        %v1343 = vadd.f32 %v1326, %v1341
        %v1344 = vmul.f32 %v1343, 0.33333334
        %v1345 = vand.u32 2147483647, %v1344
        %1346 = vst.msk [vmem:[%s313] sm:$0xff] %vm406, %v1345
        %s1347 = sand.u32 %s208, 1
        %s1348 = scalar_lea.sflag [#allocation3], %s1347
        %s1349 = sand.u32 %s208, 1
        %s1350 = smul.addr %s1349, 8
        %s1351 = scalar_lea.vmem [#allocation2], %s1350
        // Predicated region
        $region53: #{pred_forward_batched.1} parent=51 // pred_check
          %p1352 = pneg %p218
        $region54: #{pred_forward_batched.1} parent=51 // pred_check_branch
          %1354 = sbr.rel (%p1352) target = $region56
        $region55: #{pred_forward_batched.1} parent=51 // pred_region
          %s1356 = ssub.s32 128, 128
          %1357 = vsyncadd %s1348, %s1356
          %s1358 = smul.addr %s22, 128
          %s1359 = scalar_lea.hbm %s8, %s1358
          %s1361 = sshll.u32 %s1351, 4
          %s1362 = int_to_ptr.vmem [resolvable:$true] %s1361
          %1364 = dma.vmem_to_hbm [thread:$0]  %s1362, 128, %s1359, %s1348
        $region56: #{pred_forward_batched.1} parent=51 // pred_fallthru
          _
      $region52: #{pred_forward_batched.1} parent=5 // pred_fallthru
        _
      %p1365 = scmp.le.s32.totalorder 2, %s17
      // Predicated region
      $region57: #{pred_forward_batched.1} parent=5 // pred_check
        %p1366 = pneg %p1365
      $region58: #{pred_forward_batched.1} parent=5 // pred_check_branch
        %1368 = sbr.rel (%p1366) target = $region60
      $region59: #{pred_forward_batched.1} parent=5 // pred_region
        %s1369 = ssub.s32 %s17, 2
        // Predicated region
        $region61: #{pred_forward_batched.1} parent=59 // pred_check
          %p1370 = pneg %p224
        $region62: #{pred_forward_batched.1} parent=59 // pred_check_branch
          %1372 = sbr.rel (%p1370) target = $region64
        $region63: #{pred_forward_batched.1} parent=59 // pred_region
          %s1373 = sand.u32 %s209, 1
          %s1374 = scalar_lea.sflag [#allocation3], %s1373
          %s1375 = sand.u32 %s209, 1
          %s1376 = smul.addr %s1375, 8
          %s1377 = scalar_lea.vmem [#allocation2], %s1376
          %1378 = dma.done %s1374, 128
        $region64: #{pred_forward_batched.1} parent=59 // pred_fallthru
          _
      $region60: #{pred_forward_batched.1} parent=5 // pred_fallthru
        _
    $region6: #{pred_forward_batched.1} parent=1 // loop_footer
      %s21 = sadd.s32 1, %s17
    $region7: #{pred_forward_batched.1} parent=1 // loop_footer_branch
      %16 = sbr.rel target = $region3
    $region8: #{pred_forward_batched.1} parent=1 // loop_exit
      _
    %1379 = vsyncpa [#allocation3], 1
    %s1380 = scalar_lea.sflag [#allocation3], 1
    %1381 = vsyncpa %s1380, 1

</llo_original>
